<compile_context>
chip_gen: v5e
topology: v5e:2x2
jax: 0.10.0
libtpu: 0.0.40
codegen_flags: <defaults>
</compile_context>

<pallas_src>
import functools

import jax
import jax.numpy as jnp
import numpy as np
from jax.experimental import pallas as pl
from jax.experimental.pallas import tpu as pltpu


def inverted_residual_kernel(x_ref, w1_ref, dw_ref, w3_ref, b_ref, o_ref,
                             *, H, W, NB, Chid, Cout, use_res_connect):
    """NB images per grid step; everything in fused lane-dense (rows, W*C) layout.

    x_ref : (NB*H, W*Cin)     input tile (f32)
    w1_ref: (W*Cin, W*Chid)   expand 1x1 conv, block-diag over W, BN1-scaled, bf16
    dw_ref: (9, W*Chid)       depthwise 3x3 weights, BN2-scaled, W-tiled,
                              lane-boundary zeros pre-folded (f32)
    w3_ref: (W*Chid, W*Cout)  project 1x1 conv, block-diag over W, BN3-scaled, bf16
    b_ref : (3, W*Chid)       rows: BN1 bias, BN2 bias, BN3 bias (first W*Cout lanes)
    o_ref : (NB*H, W*Cout)    lane-dense output tile
    """
    M = NB * H
    WC = W * Chid

    x = x_ref[...]                                                     # (M, W*Cin) f32

    # ---- expand: 1x1 conv (block-diag over W) + BN bias + ReLU6 (MXU, bf16) --
    h = jnp.dot(x.astype(jnp.bfloat16), w1_ref[...],
                preferred_element_type=jnp.float32)                    # (M, WC) f32
    h = jnp.clip(h + b_ref[0:1, :], 0.0, 6.0)

    # ---- depthwise 3x3, stride=1, pad=1: roll taps (XLU) ---------------------
    # Lane (W) boundary handling is folded into dw_ref host-side, so the lane
    # rolls need no masking.  Only the sublane (H) boundary needs a mask, and
    # it is per-image: (row % H) guards both image top/bottom padding and
    # cross-image leakage when NB > 1.
    dwt = dw_ref[...]                                                  # (9, WC)
    row_in_img = jax.lax.broadcasted_iota(jnp.int32, (M, 1), 0) % H    # (M, 1)

    acc = jnp.zeros((M, WC), jnp.float32)
    for kh in range(3):
        if kh == 0:      # needs row i-1 (zero at image top)
            base = jnp.where(row_in_img >= 1, pltpu.roll(h, 1, axis=0), 0.0)
        elif kh == 1:    # centered row
            base = h
        else:            # needs row i+1 (zero at image bottom)
            base = jnp.where(row_in_img < H - 1, pltpu.roll(h, M - 1, axis=0), 0.0)
        # kw = 0: tap[:, w] = base[:, w-1]   (w=0 column zeroed via dw weights)
        acc = acc + pltpu.roll(base, Chid, axis=1) * dwt[3 * kh + 0:3 * kh + 1, :]
        # kw = 1: centered tap
        acc = acc + base * dwt[3 * kh + 1:3 * kh + 2, :]
        # kw = 2: tap[:, w] = base[:, w+1]   (w=W-1 column zeroed via dw weights)
        acc = acc + pltpu.roll(base, WC - Chid, axis=1) * dwt[3 * kh + 2:3 * kh + 3, :]
    acc = jnp.clip(acc + b_ref[1:2, :], 0.0, 6.0)

    # ---- project: 1x1 conv (block-diag over W) + BN bias (MXU, bf16) ---------
    y = jnp.dot(acc.astype(jnp.bfloat16), w3_ref[...],
                preferred_element_type=jnp.float32)                    # (M, W*Cout)
    y = y + b_ref[2:3, :W * Cout]

    # ---- residual connection -------------------------------------------------
    if use_res_connect:
        y = y + x.astype(jnp.float32)

    o_ref[...] = y.astype(o_ref.dtype)        # dense, unmasked 128-lane store


def _pick_images_per_step(N, H, target_rows=256):
    """Largest NB dividing N with NB*H <= target_rows while keeping the grid
    length >= 2 (so both v7x TensorCores get work).  target_rows=256 fills the
    v6e/v7x 256x256 MXU; v5e's 4x128 MXU is already full at 128 rows."""
    min_grid = 2 if N >= 2 else 1
    nb = 1
    for cand in range(1, N + 1):
        if N % cand == 0 and cand * H <= target_rows and N // cand >= min_grid:
            nb = cand
    return nb


def inverted_residual(x_nhwc, params, *, stride, use_res_connect):
    assert stride == 1  # TODO(synk): stride=2 not implemented in-kernel
    N, H, W, Cin = x_nhwc.shape
    w1, sb1, dw, sb2, w3, sb3 = params
    Chid = w1.shape[1]
    Cout = w3.shape[1]
    # Lane-dense fused layout requires 128-multiple fused channel dims.
    assert (W * Cin) % 128 == 0 and (W * Chid) % 128 == 0 and (W * Cout) % 128 == 0

    NB = _pick_images_per_step(N, H)
    M = NB * H

    # ---- host-side folding (done once, outside the kernel) -----------------
    w1s = w1 * sb1[0][None, :]                              # BN1 scale into weights
    w3s = w3 * sb3[0][None, :]                              # BN3 scale into weights
    eye_w = jnp.eye(W, dtype=jnp.float32)
    w1_big = jnp.kron(eye_w, w1s).astype(jnp.bfloat16)      # (W*Cin,  W*Chid) bf16
    w3_big = jnp.kron(eye_w, w3s).astype(jnp.bfloat16)      # (W*Chid, W*Cout) bf16

    dw_t = jnp.tile(dw * sb2[0][None, :], (1, W))           # (9, W*Chid), BN2-scaled
    # Fold lane (W) boundary masks into the weights: kw=0 taps have no left
    # neighbour at w=0; kw=2 taps have no right neighbour at w=W-1.
    dw_t = dw_t.at[0::3, :Chid].set(0.0)
    dw_t = dw_t.at[2::3, (W - 1) * Chid:].set(0.0)

    b1_t = jnp.tile(sb1[1], W)                                       # (W*Chid,)
    b2_t = jnp.tile(sb2[1], W)                                       # (W*Chid,)
    b3_t = jnp.pad(jnp.tile(sb3[1], W), (0, W * (Chid - Cout)))      # pad to W*Chid
    biases = jnp.stack([b1_t, b2_t, b3_t], axis=0)                   # (3, W*Chid)

    x2 = x_nhwc.reshape(N * H, W * Cin)                     # lane-dense view

    kernel = functools.partial(inverted_residual_kernel, H=H, W=W, NB=NB,
                               Chid=Chid, Cout=Cout,
                               use_res_connect=use_res_connect)

    def const_spec(shape):  # grid-invariant operand: fetch once, single-buffer
        return pl.BlockSpec(shape, lambda n: (0, 0), pipeline_mode=pl.Buffered(1))

    out2 = pl.pallas_call(
        kernel,
        out_shape=jax.ShapeDtypeStruct((N * H, W * Cout), x_nhwc.dtype),
        grid_spec=pltpu.PrefetchScalarGridSpec(
            num_scalar_prefetch=0,
            grid=(N // NB,),
            in_specs=[
                pl.BlockSpec((M, W * Cin), lambda n: (n, 0)),
                const_spec((W * Cin, W * Chid)),
                const_spec((9, W * Chid)),
                const_spec((W * Chid, W * Cout)),
                const_spec((3, W * Chid)),
            ],
            out_specs=pl.BlockSpec((M, W * Cout), lambda n: (n, 0)),
        ),
        compiler_params=pltpu.CompilerParams(
            dimension_semantics=("parallel",),
            vmem_limit_bytes=16 * 1024 * 1024),
    )(x2, w1_big, dw_t, w3_big, biases)
    return out2.reshape(N, H, W, Cout)


# ---------------------------- glue / reference ------------------------------

def make_bn_scale_bias(key, c, eps=1e-5):
    k1, k2, k3, k4 = jax.random.split(key, 4)
    gamma = jax.random.uniform(k1, (c,), jnp.float32, 0.5, 1.5)
    beta = 0.1 * jax.random.normal(k2, (c,), jnp.float32)
    running_mean = 0.1 * jax.random.normal(k3, (c,), jnp.float32)
    running_var = jax.random.uniform(k4, (c,), jnp.float32, 0.5, 1.5)
    scale = gamma / jnp.sqrt(running_var + eps)
    bias = beta - running_mean * scale
    return jnp.stack([scale, bias], axis=0)            # (2, c)


def ref_forward(x, w1, sb1, dw, sb2, w3, sb3, use_res_connect):
    """Pure-JAX NHWC reference (unfolded f32 parameters)."""
    Chid = w1.shape[1]
    h = jnp.einsum('nhwc,cd->nhwd', x, w1)
    h = jnp.clip(h * sb1[0] + sb1[1], 0.0, 6.0)
    dw_k = dw.reshape(3, 3, 1, Chid)                   # HWIO, feature groups
    d = jax.lax.conv_general_dilated(
        h, dw_k, window_strides=(1, 1), padding=((1, 1), (1, 1)),
        dimension_numbers=('NHWC', 'HWIO', 'NHWC'),
        feature_group_count=Chid)
    d = jnp.clip(d * sb2[0] + sb2[1], 0.0, 6.0)
    y = jnp.einsum('nhwd,do->nhwo', d, w3)
    y = y * sb3[0] + sb3[1]
    if use_res_connect:
        y = y + x
    return y


if __name__ == "__main__":
    # InvertedResidual(inp=8, oup=8, stride=1, expand_ratio=4)
    N, Cin, H, W = 8, 8, 16, 16
    stride, expand_ratio = 1, 4
    Cout = Cin
    Chid = int(round(Cin * expand_ratio))
    use_res_connect = (stride == 1 and Cin == Cout)

    key = jax.random.PRNGKey(0)
    keys = jax.random.split(key, 8)

    # PyTorch-style NCHW input, deterministic.
    x_nchw = jax.random.normal(keys[0], (N, Cin, H, W), jnp.float32)

    # Deterministic parameters (shapes follow the nn.Module __init__):
    #   Conv2d(Cin, Chid, 1): (Chid, Cin, 1, 1)          -> stored as (Cin, Chid)
    #   Conv2d(Chid, Chid, 3, groups=Chid): (Chid,1,3,3) -> (9, Chid)
    #   Conv2d(Chid, Cout, 1): (Cout, Chid, 1, 1)        -> (Chid, Cout)
    w1 = jax.random.normal(keys[1], (Cin, Chid), jnp.float32) / np.sqrt(Cin)
    sb1 = make_bn_scale_bias(keys[2], Chid)
    dw = jax.random.normal(keys[3], (9, Chid), jnp.float32) / 3.0
    sb2 = make_bn_scale_bias(keys[4], Chid)
    w3 = jax.random.normal(keys[5], (Chid, Cout), jnp.float32) / np.sqrt(Chid)
    sb3 = make_bn_scale_bias(keys[6], Cout)

    params = (w1, sb1, dw, sb2, w3, sb3)

    # NCHW -> NHWC glue, run kernel, NHWC -> NCHW back.
    x_nhwc = jnp.transpose(x_nchw, (0, 2, 3, 1))
    out_nhwc = inverted_residual(x_nhwc, params, stride=stride,
                                 use_res_connect=use_res_connect)
    out_nchw = jnp.transpose(out_nhwc, (0, 3, 1, 2))
    jax.block_until_ready(out_nchw)

    # Numerical check against a pure-JAX f32 reference.  The two 1x1 convs run
    # bf16 on the MXU (f32 accumulation), so tolerance is slightly widened.
    ref_nhwc = ref_forward(x_nhwc, w1, sb1, dw, sb2, w3, sb3, use_res_connect)
    np.testing.assert_allclose(np.asarray(out_nhwc), np.asarray(ref_nhwc),
                               rtol=5e-2, atol=5e-2)

    print("KERNEL_OK")
</pallas_src>

<mosaic_0001>
module attributes {stable_mosaic.version = 11 : i64} {
  func.func @inverted_residual_kernel(%arg0: i32, %arg1: memref<64x128xf32, #tpu.memory_space<vmem>>, %arg2: memref<128x512xbf16, #tpu.memory_space<vmem>>, %arg3: memref<9x512xf32, #tpu.memory_space<vmem>>, %arg4: memref<512x128xbf16, #tpu.memory_space<vmem>>, %arg5: memref<3x512xf32, #tpu.memory_space<vmem>>, %arg6: memref<64x128xf32, #tpu.memory_space<vmem>>) attributes {dimension_semantics = [#tpu.dimension_semantics<parallel>], iteration_bounds = array<i64: 2>, scalar_prefetch = 0 : i64, scratch_operands = 0 : i64, tpu.core_type = #tpu.core_type<tc>, window_params = [{transform_indices = @transform_0, window_bounds = array<i64: 64, 128>}, {pipeline_mode = #tpu.pipeline_mode<synchronous>, transform_indices = @transform_1, window_bounds = array<i64: 128, 512>}, {pipeline_mode = #tpu.pipeline_mode<synchronous>, transform_indices = @transform_2, window_bounds = array<i64: 9, 512>}, {pipeline_mode = #tpu.pipeline_mode<synchronous>, transform_indices = @transform_3, window_bounds = array<i64: 512, 128>}, {pipeline_mode = #tpu.pipeline_mode<synchronous>, transform_indices = @transform_4, window_bounds = array<i64: 3, 512>}, {transform_indices = @transform_5, window_bounds = array<i64: 64, 128>}]} {
    %c0 = arith.constant 0 : index
    %c0_0 = arith.constant 0 : index
    %0 = vector.load %arg1[%c0, %c0_0] : memref<64x128xf32, #tpu.memory_space<vmem>>, vector<64x128xf32>
    %1 = arith.truncf %0 : vector<64x128xf32> to vector<64x128xbf16>
    %c0_1 = arith.constant 0 : index
    %c0_2 = arith.constant 0 : index
    %2 = vector.load %arg2[%c0_1, %c0_2] : memref<128x512xbf16, #tpu.memory_space<vmem>>, vector<128x512xbf16>
    %cst = arith.constant dense<0.000000e+00> : vector<64x512xf32>
    %3 = tpu.matmul %1, %2, %cst {dimension_numbers = #tpu.dot_dimension_numbers<[1], [0], [0], [1], [0, 0, 1, 1], [], []>} : vector<64x128xbf16>, vector<128x512xbf16>, vector<64x512xf32> -> vector<64x512xf32>
    %c0_3 = arith.constant 0 : index
    %c0_4 = arith.constant 0 : index
    %4 = vector.load %arg5[%c0_3, %c0_4] : memref<3x512xf32, #tpu.memory_space<vmem>>, vector<1x512xf32>
    %5 = vector.broadcast %4 : vector<1x512xf32> to vector<64x512xf32>
    %6 = arith.addf %3, %5 : vector<64x512xf32>
    %cst_5 = arith.constant 0.000000e+00 : f32
    %cst_6 = arith.constant 6.000000e+00 : f32
    %7 = vector.broadcast %cst_5 : f32 to vector<64x512xf32>
    %8 = arith.maximumf %7, %6 : vector<64x512xf32>
    %9 = vector.broadcast %cst_6 : f32 to vector<64x512xf32>
    %10 = arith.minimumf %9, %8 : vector<64x512xf32>
    %c0_7 = arith.constant 0 : index
    %c0_8 = arith.constant 0 : index
    %11 = vector.load %arg3[%c0_7, %c0_8] : memref<9x512xf32, #tpu.memory_space<vmem>>, vector<9x512xf32>
    %12 = tpu.iota {dimensions = array<i32: 0>} : vector<64x1xi32>
    %c16_i32 = arith.constant 16 : i32
    %c0_i32 = arith.constant 0 : i32
    %13 = arith.cmpi eq, %c16_i32, %c0_i32 : i32
    %c1_i32 = arith.constant 1 : i32
    %14 = arith.select %13, %c1_i32, %c16_i32 : i32
    %15 = vector.broadcast %14 : i32 to vector<64x1xi32>
    %16 = arith.remsi %12, %15 : vector<64x1xi32>
    %c0_i32_9 = arith.constant 0 : i32
    %17 = vector.broadcast %c0_i32_9 : i32 to vector<64x1xi32>
    %18 = arith.cmpi ne, %16, %17 : vector<64x1xi32>
    %c0_i32_10 = arith.constant 0 : i32
    %19 = vector.broadcast %c0_i32_10 : i32 to vector<64x1xi32>
    %20 = arith.cmpi slt, %16, %19 : vector<64x1xi32>
    %c0_i32_11 = arith.constant 0 : i32
    %21 = arith.cmpi slt, %14, %c0_i32_11 : i32
    %22 = vector.broadcast %21 : i1 to vector<64x1xi1>
    %23 = vector.broadcast %22 : vector<64x1xi1> to vector<64x1xi1>
    %24 = arith.xori %20, %23 : vector<64x1xi1>
    %25 = arith.andi %24, %18 : vector<64x1xi1>
    %26 = vector.broadcast %14 : i32 to vector<64x1xi32>
    %27 = arith.addi %16, %26 : vector<64x1xi32>
    %28 = arith.select %25, %27, %16 : vector<64x1xi1>, vector<64x1xi32>
    %cst_12 = arith.constant 0.000000e+00 : f32
    %29 = vector.broadcast %cst_12 : f32 to vector<64x512xf32>
    %c1_i32_13 = arith.constant 1 : i32
    %30 = vector.broadcast %c1_i32_13 : i32 to vector<64x1xi32>
    %31 = arith.cmpi sge, %28, %30 : vector<64x1xi32>
    %c1_i32_14 = arith.constant 1 : i32
    %32 = tpu.dynamic_rotate %10 by %c1_i32_14 dim 0 : vector<64x512xf32>, i32 -> vector<64x512xf32>
    %cst_15 = arith.constant 0.000000e+00 : f32
    %33 = vector.shape_cast %31 : vector<64x1xi1> to vector<64x1xi1>
    %34 = vector.broadcast %33 : vector<64x1xi1> to vector<64x512xi1>
    %35 = vector.broadcast %cst_15 : f32 to vector<64x512xf32>
    %36 = arith.select %34, %32, %35 : vector<64x512xi1>, vector<64x512xf32>
    %c32_i32 = arith.constant 32 : i32
    %37 = tpu.dynamic_rotate %36 by %c32_i32 dim 1 : vector<64x512xf32>, i32 -> vector<64x512xf32>
    %38 = vector.extract_strided_slice %11 {offsets = [0, 0], sizes = [1, 512], strides = [1, 1]} : vector<9x512xf32> to vector<1x512xf32>
    %39 = vector.broadcast %38 : vector<1x512xf32> to vector<64x512xf32>
    %40 = arith.mulf %37, %39 : vector<64x512xf32>
    %41 = arith.addf %29, %40 : vector<64x512xf32>
    %42 = vector.extract_strided_slice %11 {offsets = [1, 0], sizes = [1, 512], strides = [1, 1]} : vector<9x512xf32> to vector<1x512xf32>
    %43 = vector.broadcast %42 : vector<1x512xf32> to vector<64x512xf32>
    %44 = arith.mulf %36, %43 : vector<64x512xf32>
    %45 = arith.addf %41, %44 : vector<64x512xf32>
    %c480_i32 = arith.constant 480 : i32
    %46 = tpu.dynamic_rotate %36 by %c480_i32 dim 1 : vector<64x512xf32>, i32 -> vector<64x512xf32>
    %47 = vector.extract_strided_slice %11 {offsets = [2, 0], sizes = [1, 512], strides = [1, 1]} : vector<9x512xf32> to vector<1x512xf32>
    %48 = vector.broadcast %47 : vector<1x512xf32> to vector<64x512xf32>
    %49 = arith.mulf %46, %48 : vector<64x512xf32>
    %50 = arith.addf %45, %49 : vector<64x512xf32>
    %c32_i32_16 = arith.constant 32 : i32
    %51 = tpu.dynamic_rotate %10 by %c32_i32_16 dim 1 : vector<64x512xf32>, i32 -> vector<64x512xf32>
    %52 = vector.extract_strided_slice %11 {offsets = [3, 0], sizes = [1, 512], strides = [1, 1]} : vector<9x512xf32> to vector<1x512xf32>
    %53 = vector.broadcast %52 : vector<1x512xf32> to vector<64x512xf32>
    %54 = arith.mulf %51, %53 : vector<64x512xf32>
    %55 = arith.addf %50, %54 : vector<64x512xf32>
    %56 = vector.extract_strided_slice %11 {offsets = [4, 0], sizes = [1, 512], strides = [1, 1]} : vector<9x512xf32> to vector<1x512xf32>
    %57 = vector.broadcast %56 : vector<1x512xf32> to vector<64x512xf32>
    %58 = arith.mulf %10, %57 : vector<64x512xf32>
    %59 = arith.addf %55, %58 : vector<64x512xf32>
    %c480_i32_17 = arith.constant 480 : i32
    %60 = tpu.dynamic_rotate %10 by %c480_i32_17 dim 1 : vector<64x512xf32>, i32 -> vector<64x512xf32>
    %61 = vector.extract_strided_slice %11 {offsets = [5, 0], sizes = [1, 512], strides = [1, 1]} : vector<9x512xf32> to vector<1x512xf32>
    %62 = vector.broadcast %61 : vector<1x512xf32> to vector<64x512xf32>
    %63 = arith.mulf %60, %62 : vector<64x512xf32>
    %64 = arith.addf %59, %63 : vector<64x512xf32>
    %c15_i32 = arith.constant 15 : i32
    %65 = vector.broadcast %c15_i32 : i32 to vector<64x1xi32>
    %66 = arith.cmpi slt, %28, %65 : vector<64x1xi32>
    %c63_i32 = arith.constant 63 : i32
    %67 = tpu.dynamic_rotate %10 by %c63_i32 dim 0 : vector<64x512xf32>, i32 -> vector<64x512xf32>
    %cst_18 = arith.constant 0.000000e+00 : f32
    %68 = vector.shape_cast %66 : vector<64x1xi1> to vector<64x1xi1>
    %69 = vector.broadcast %68 : vector<64x1xi1> to vector<64x512xi1>
    %70 = vector.broadcast %cst_18 : f32 to vector<64x512xf32>
    %71 = arith.select %69, %67, %70 : vector<64x512xi1>, vector<64x512xf32>
    %c32_i32_19 = arith.constant 32 : i32
    %72 = tpu.dynamic_rotate %71 by %c32_i32_19 dim 1 : vector<64x512xf32>, i32 -> vector<64x512xf32>
    %73 = vector.extract_strided_slice %11 {offsets = [6, 0], sizes = [1, 512], strides = [1, 1]} : vector<9x512xf32> to vector<1x512xf32>
    %74 = vector.broadcast %73 : vector<1x512xf32> to vector<64x512xf32>
    %75 = arith.mulf %72, %74 : vector<64x512xf32>
    %76 = arith.addf %64, %75 : vector<64x512xf32>
    %77 = vector.extract_strided_slice %11 {offsets = [7, 0], sizes = [1, 512], strides = [1, 1]} : vector<9x512xf32> to vector<1x512xf32>
    %78 = vector.broadcast %77 : vector<1x512xf32> to vector<64x512xf32>
    %79 = arith.mulf %71, %78 : vector<64x512xf32>
    %80 = arith.addf %76, %79 : vector<64x512xf32>
    %c480_i32_20 = arith.constant 480 : i32
    %81 = tpu.dynamic_rotate %71 by %c480_i32_20 dim 1 : vector<64x512xf32>, i32 -> vector<64x512xf32>
    %82 = vector.extract_strided_slice %11 {offsets = [8, 0], sizes = [1, 512], strides = [1, 1]} : vector<9x512xf32> to vector<1x512xf32>
    %83 = vector.broadcast %82 : vector<1x512xf32> to vector<64x512xf32>
    %84 = arith.mulf %81, %83 : vector<64x512xf32>
    %85 = arith.addf %80, %84 : vector<64x512xf32>
    %c1 = arith.constant 1 : index
    %c0_21 = arith.constant 0 : index
    %86 = vector.load %arg5[%c1, %c0_21] : memref<3x512xf32, #tpu.memory_space<vmem>>, vector<1x512xf32>
    %87 = vector.broadcast %86 : vector<1x512xf32> to vector<64x512xf32>
    %88 = arith.addf %85, %87 : vector<64x512xf32>
    %cst_22 = arith.constant 0.000000e+00 : f32
    %cst_23 = arith.constant 6.000000e+00 : f32
    %89 = vector.broadcast %cst_22 : f32 to vector<64x512xf32>
    %90 = arith.maximumf %89, %88 : vector<64x512xf32>
    %91 = vector.broadcast %cst_23 : f32 to vector<64x512xf32>
    %92 = arith.minimumf %91, %90 : vector<64x512xf32>
    %93 = arith.truncf %92 : vector<64x512xf32> to vector<64x512xbf16>
    %c0_24 = arith.constant 0 : index
    %c0_25 = arith.constant 0 : index
    %94 = vector.load %arg4[%c0_24, %c0_25] : memref<512x128xbf16, #tpu.memory_space<vmem>>, vector<512x128xbf16>
    %cst_26 = arith.constant dense<0.000000e+00> : vector<64x128xf32>
    %95 = tpu.matmul %93, %94, %cst_26 {dimension_numbers = #tpu.dot_dimension_numbers<[1], [0], [0], [1], [0, 0, 1, 1], [], []>} : vector<64x512xbf16>, vector<512x128xbf16>, vector<64x128xf32> -> vector<64x128xf32>
    %c2 = arith.constant 2 : index
    %c0_27 = arith.constant 0 : index
    %96 = vector.load %arg5[%c2, %c0_27] : memref<3x512xf32, #tpu.memory_space<vmem>>, vector<1x128xf32>
    %97 = vector.broadcast %96 : vector<1x128xf32> to vector<64x128xf32>
    %98 = arith.addf %95, %97 : vector<64x128xf32>
    %99 = arith.addf %98, %0 : vector<64x128xf32>
    %c0_28 = arith.constant 0 : index
    %c0_29 = arith.constant 0 : index
    %100 = vector.load %arg6[%c0_28, %c0_29] : memref<64x128xf32, #tpu.memory_space<vmem>>, vector<64x128xf32>
    tpu.vector_store %arg6[%c0_28, %c0_29], %99 {strides = array<i32>} : memref<64x128xf32, #tpu.memory_space<vmem>>, vector<64x128xf32>,
    return
  }
  func.func @transform_0(%arg0: i32) -> (i32, i32) {
    %c0_i32 = arith.constant 0 : i32
    %c0_i32_0 = arith.constant 0 : i32
    return %arg0, %c0_i32 : i32, i32
  }
  func.func @transform_1(%arg0: i32) -> (i32, i32) {
    %c0_i32 = arith.constant 0 : i32
    %c0_i32_0 = arith.constant 0 : i32
    %c0_i32_1 = arith.constant 0 : i32
    return %c0_i32, %c0_i32_0 : i32, i32
  }
  func.func @transform_2(%arg0: i32) -> (i32, i32) {
    %c0_i32 = arith.constant 0 : i32
    %c0_i32_0 = arith.constant 0 : i32
    %c0_i32_1 = arith.constant 0 : i32
    return %c0_i32, %c0_i32_0 : i32, i32
  }
  func.func @transform_3(%arg0: i32) -> (i32, i32) {
    %c0_i32 = arith.constant 0 : i32
    %c0_i32_0 = arith.constant 0 : i32
    %c0_i32_1 = arith.constant 0 : i32
    return %c0_i32, %c0_i32_0 : i32, i32
  }
  func.func @transform_4(%arg0: i32) -> (i32, i32) {
    %c0_i32 = arith.constant 0 : i32
    %c0_i32_0 = arith.constant 0 : i32
    %c0_i32_1 = arith.constant 0 : i32
    return %c0_i32, %c0_i32_0 : i32, i32
  }
  func.func @transform_5(%arg0: i32) -> (i32, i32) {
    %c0_i32 = arith.constant 0 : i32
    %c0_i32_0 = arith.constant 0 : i32
    return %arg0, %c0_i32 : i32, i32
  }
}

</mosaic_0001>

<llo_original>
// kernel: tpu_custom_call.1
$region0: #{tpu_custom_call.1}
  #allocation0 [shape = 'u32[]', space=smem, size = 0x4, offset = 0x4, fixed_abs, tag = 'smem constant byte address 0x4 - core index']
  #allocation1 [shape = 'u32[72,128]{1,0:T(1,128)}', space=vmem, size = 0x9000, scoped, tag = 'internal scratch']
  %s0 = inlined_call_operand.hbm [shape: f32[128,128], index: 0, kind: input, shape index: {}]
  %s1 = inlined_call_operand.hbm [shape: bf16[128,512], index: 1, kind: input, shape index: {}]
  %s2 = inlined_call_operand.hbm [shape: f32[9,512], index: 2, kind: input, shape index: {}]
  %s3 = inlined_call_operand.hbm [shape: bf16[512,128], index: 3, kind: input, shape index: {}]
  %s4 = inlined_call_operand.hbm [shape: f32[3,512], index: 4, kind: input, shape index: {}]
  %s5 = inlined_call_operand.hbm [shape: f32[128,128], index: 5, kind: output, shape index: {}]
  %s6 = sld [smem:[#allocation0]]
  $region73: #{tpu_custom_call.1} parent=0
    _
  %s8 = ssub.s32 1, %s6
  %s9 = scalar_select 0, %s8, %s6
  $region1: #{tpu_custom_call.1} parent=0
    #allocation2 [shape = 'u8[65536]{0}', space=vmem, size = 0x10000, scoped, tag = 'input window, operand 0']
    #allocation3 [shape = 's32[2]{0}', space=sflag, size = 0x8, scoped, tag = 'scoped memory for tpu_custom_call.1']
    #allocation4 [shape = 's32[2]{0}', space=sflag, size = 0x8, scoped, tag = 'scoped memory for tpu_custom_call.1']
    #allocation5 [shape = 'u8[131072]{0}', space=vmem, size = 0x20000, scoped, tag = 'input window, operand 1, single buffered']
    #allocation6 [shape = 's32[1]{0}', space=sflag, size = 0x4, scoped, tag = 'scoped memory for tpu_custom_call.1']
    #allocation7 [shape = 'u8[32768]{0}', space=vmem, size = 0x8000, scoped, tag = 'input window, operand 2, single buffered']
    #allocation8 [shape = 'u8[131072]{0}', space=vmem, size = 0x20000, scoped, tag = 'input window, operand 3, single buffered']
    #allocation9 [shape = 's32[1]{0}', space=sflag, size = 0x4, scoped, tag = 'scoped memory for tpu_custom_call.1']
    #allocation10 [shape = 'u8[8192]{0}', space=vmem, size = 0x2000, scoped, tag = 'input window, operand 4, single buffered']
    #allocation11 [shape = 'u8[65536]{0}', space=vmem, size = 0x10000, scoped, tag = 'output window, operand 0']
    %10 = vsyncpa [#allocation3], 0
    %s11 = scalar_lea.sflag [#allocation3], 1
    %12 = vsyncpa %s11, 0
    %13 = vsyncpa [#allocation6], 0
    %14 = vsyncpa [#allocation9], 0
    %15 = vsyncpa [#allocation4], 0
    %s16 = scalar_lea.sflag [#allocation4], 1
    %17 = vsyncpa %s16, 0
    loop: start=0, step=1, limit=4
    $region2: #{tpu_custom_call.1} parent=1 // loop_pre_header
      _
    $region3: #{tpu_custom_call.1} parent=1 // loop_header
      %s19 = sphi 0, %s23
      %p20 = scmp.ge.s32.totalorder %s19, 4
      %s29 = sphi 0, %s31
      %s32 = sphi 0, %s29
      %s33 = sphi 0, %s32
      %s49 = sphi 0, %s33
      %s53 = sphi 0, %s53
      %s55 = sphi 0, %s53
      %s56 = sphi 0, %s55
      %s70 = sphi 0, %s56
      %s74 = sphi 0, %s74
      %s76 = sphi 0, %s74
      %s77 = sphi 0, %s76
      %s91 = sphi 0, %s77
      %s95 = sphi 0, %s95
      %s97 = sphi 0, %s95
      %s98 = sphi 0, %s97
      %s112 = sphi 0, %s98
      %s116 = sphi 0, %s116
      %s118 = sphi 0, %s116
      %s119 = sphi 0, %s118
      %s133 = sphi 0, %s119
      %s139 = sphi 0, %s141
      %s142 = sphi 0, %s139
      %s143 = sphi 0, %s142
      %s159 = sphi 0, %s143
    $region4: #{tpu_custom_call.1} parent=1 // loop_header_branch
      %22 = sbr.rel (%p20) target = $region8
    $region5: #{tpu_custom_call.1} parent=1 // loop_body
      %s24 = ssub.s32 %s19, 1
      %s25 = ssub.s32 %s19, 2
      %s26 = sadd.s32 %s19, 1
      %s27 = ssub.s32 %s19, %s26
      %p28 = scmp.eq.s32.totalorder %s27, 0
      %s30 = sadd.s32 %s29, 1
      %s31 = scalar_select %p28, %s29, %s30
      %p34 = pneg %p28
      %p35 = scmp.eq.s32.totalorder %s19, 1
      %p36 = por %p34, %p35
      %p37 = scmp.ne.s32.totalorder %s29, %s32
      %p38 = scmp.eq.s32.totalorder %s19, 0
      %p39 = por %p37, %p38
      %p40 = scmp.ne.s32.totalorder %s29, %s32
      %p41 = scmp.eq.s32.totalorder %s24, 1
      %p42 = por %p40, %p41
      %p43 = scmp.ne.s32.totalorder %s32, %s33
      %p44 = scmp.eq.s32.totalorder %s24, 0
      %p45 = por %p43, %p44
      %p46 = scmp.ne.s32.totalorder %s32, %s33
      %p47 = scmp.eq.s32.totalorder %s25, 1
      %p48 = por %p46, %p47
      %p50 = scmp.ne.s32.totalorder %s33, %s49
      %p51 = scmp.eq.s32.totalorder %s25, 0
      %p52 = por %p50, %p51
      %s54 = sadd.s32 %s53, 1
      %p57 = scmp.eq.s32.totalorder %s19, 1
      %p58 = scmp.ne.s32.totalorder %s53, %s55
      %p59 = scmp.eq.s32.totalorder %s19, 0
      %p60 = por %p58, %p59
      %p61 = scmp.ne.s32.totalorder %s53, %s55
      %p62 = scmp.eq.s32.totalorder %s24, 1
      %p63 = por %p61, %p62
      %p64 = scmp.ne.s32.totalorder %s55, %s56
      %p65 = scmp.eq.s32.totalorder %s24, 0
      %p66 = por %p64, %p65
      %p67 = scmp.ne.s32.totalorder %s55, %s56
      %p68 = scmp.eq.s32.totalorder %s25, 1
      %p69 = por %p67, %p68
      %p71 = scmp.ne.s32.totalorder %s56, %s70
      %p72 = scmp.eq.s32.totalorder %s25, 0
      %p73 = por %p71, %p72
      %s75 = sadd.s32 %s74, 1
      %p78 = scmp.eq.s32.totalorder %s19, 1
      %p79 = scmp.ne.s32.totalorder %s74, %s76
      %p80 = scmp.eq.s32.totalorder %s19, 0
      %p81 = por %p79, %p80
      %p82 = scmp.ne.s32.totalorder %s74, %s76
      %p83 = scmp.eq.s32.totalorder %s24, 1
      %p84 = por %p82, %p83
      %p85 = scmp.ne.s32.totalorder %s76, %s77
      %p86 = scmp.eq.s32.totalorder %s24, 0
      %p87 = por %p85, %p86
      %p88 = scmp.ne.s32.totalorder %s76, %s77
      %p89 = scmp.eq.s32.totalorder %s25, 1
      %p90 = por %p88, %p89
      %p92 = scmp.ne.s32.totalorder %s77, %s91
      %p93 = scmp.eq.s32.totalorder %s25, 0
      %p94 = por %p92, %p93
      %s96 = sadd.s32 %s95, 1
      %p99 = scmp.eq.s32.totalorder %s19, 1
      %p100 = scmp.ne.s32.totalorder %s95, %s97
      %p101 = scmp.eq.s32.totalorder %s19, 0
      %p102 = por %p100, %p101
      %p103 = scmp.ne.s32.totalorder %s95, %s97
      %p104 = scmp.eq.s32.totalorder %s24, 1
      %p105 = por %p103, %p104
      %p106 = scmp.ne.s32.totalorder %s97, %s98
      %p107 = scmp.eq.s32.totalorder %s24, 0
      %p108 = por %p106, %p107
      %p109 = scmp.ne.s32.totalorder %s97, %s98
      %p110 = scmp.eq.s32.totalorder %s25, 1
      %p111 = por %p109, %p110
      %p113 = scmp.ne.s32.totalorder %s98, %s112
      %p114 = scmp.eq.s32.totalorder %s25, 0
      %p115 = por %p113, %p114
      %s117 = sadd.s32 %s116, 1
      %p120 = scmp.eq.s32.totalorder %s19, 1
      %p121 = scmp.ne.s32.totalorder %s116, %s118
      %p122 = scmp.eq.s32.totalorder %s19, 0
      %p123 = por %p121, %p122
      %p124 = scmp.ne.s32.totalorder %s116, %s118
      %p125 = scmp.eq.s32.totalorder %s24, 1
      %p126 = por %p124, %p125
      %p127 = scmp.ne.s32.totalorder %s118, %s119
      %p128 = scmp.eq.s32.totalorder %s24, 0
      %p129 = por %p127, %p128
      %p130 = scmp.ne.s32.totalorder %s118, %s119
      %p131 = scmp.eq.s32.totalorder %s25, 1
      %p132 = por %p130, %p131
      %p134 = scmp.ne.s32.totalorder %s119, %s133
      %p135 = scmp.eq.s32.totalorder %s25, 0
      %p136 = por %p134, %p135
      %s137 = ssub.s32 %s19, %s26
      %p138 = scmp.eq.s32.totalorder %s137, 0
      %s140 = sadd.s32 %s139, 1
      %s141 = scalar_select %p138, %s139, %s140
      %p144 = pneg %p138
      %p145 = scmp.eq.s32.totalorder %s19, 1
      %p146 = por %p144, %p145
      %p147 = scmp.ne.s32.totalorder %s139, %s142
      %p148 = scmp.eq.s32.totalorder %s19, 0
      %p149 = por %p147, %p148
      %p150 = scmp.ne.s32.totalorder %s139, %s142
      %p151 = scmp.eq.s32.totalorder %s24, 1
      %p152 = por %p150, %p151
      %p153 = scmp.ne.s32.totalorder %s142, %s143
      %p154 = scmp.eq.s32.totalorder %s24, 0
      %p155 = por %p153, %p154
      %p156 = scmp.ne.s32.totalorder %s142, %s143
      %p157 = scmp.eq.s32.totalorder %s25, 1
      %p158 = por %p156, %p157
      %p160 = scmp.ne.s32.totalorder %s143, %s159
      %p161 = scmp.eq.s32.totalorder %s25, 0
      %p162 = por %p160, %p161
      %p163 = scmp.le.s32.totalorder 1, %s19
      %p164 = scmp.lt.s32.totalorder %s19, 3
      %p165 = pnand %p163, %p164
      %p166 = pneg %p165
      // Predicated region
      $region9: #{tpu_custom_call.1} parent=5 // pred_check
        _
      $region10: #{tpu_custom_call.1} parent=5 // pred_check_branch
        %168 = sbr.rel (%p165) target = $region12
      $region11: #{tpu_custom_call.1} parent=5 // pred_region
        %s169 = ssub.s32 %s19, 1
        // Predicated region
        $region13: #{tpu_custom_call.1} parent=11 // pred_check
          %p170 = pneg %p66
        $region14: #{tpu_custom_call.1} parent=11 // pred_check_branch
          %172 = sbr.rel (%p170) target = $region16
        $region15: #{tpu_custom_call.1} parent=11 // pred_region
          %174 = vsyncadd [#allocation6], 0
          %s175 = sshll.u32 %s1, 4
          %s176 = int_to_ptr.hbm [resolvable:$true] %s175
          %s177 = sshll.u32 [#allocation5], 4
          %s178 = int_to_ptr.vmem [resolvable:$true] %s177
          %183 = dma.hbm_to_vmem [thread:$0]  %s176, 4096, %s178, [#allocation6], 256, 256, 16
        $region16: #{tpu_custom_call.1} parent=11 // pred_fallthru
          _
        // Predicated region
        $region17: #{tpu_custom_call.1} parent=11 // pred_check
          %p184 = pneg %p87
        $region18: #{tpu_custom_call.1} parent=11 // pred_check_branch
          %186 = sbr.rel (%p184) target = $region20
        $region19: #{tpu_custom_call.1} parent=11 // pred_region
          %188 = vsyncadd [#allocation6], 0
          %s189 = sshll.u32 %s2, 4
          %s190 = int_to_ptr.hbm [resolvable:$true] %s189
          %s191 = sshll.u32 [#allocation7], 4
          %s192 = int_to_ptr.vmem [resolvable:$true] %s191
          %197 = dma.hbm_to_vmem [thread:$0]  %s190, 1024, %s192, [#allocation6], 512, 512, 32
        $region20: #{tpu_custom_call.1} parent=11 // pred_fallthru
          _
        // Predicated region
        $region21: #{tpu_custom_call.1} parent=11 // pred_check
          %p198 = pneg %p108
        $region22: #{tpu_custom_call.1} parent=11 // pred_check_branch
          %200 = sbr.rel (%p198) target = $region24
        $region23: #{tpu_custom_call.1} parent=11 // pred_region
          %202 = vsyncadd [#allocation9], 0
          %s203 = sshll.u32 %s3, 4
          %s204 = int_to_ptr.hbm [resolvable:$true] %s203
          %s205 = sshll.u32 [#allocation8], 4
          %s206 = int_to_ptr.vmem [resolvable:$true] %s205
          %211 = dma.hbm_to_vmem [thread:$0]  %s204, 4096, %s206, [#allocation9], 64, 64, 4
        $region24: #{tpu_custom_call.1} parent=11 // pred_fallthru
          _
        // Predicated region
        $region25: #{tpu_custom_call.1} parent=11 // pred_check
          %p212 = pneg %p129
        $region26: #{tpu_custom_call.1} parent=11 // pred_check_branch
          %214 = sbr.rel (%p212) target = $region28
        $region27: #{tpu_custom_call.1} parent=11 // pred_region
          %216 = vsyncadd [#allocation9], 0
          %s218 = sshll.u32 %s4, 4
          %s219 = int_to_ptr.hbm [resolvable:$true] %s218
          %s220 = sshll.u32 [#allocation10], 4
          %s221 = int_to_ptr.vmem [resolvable:$true] %s220
          %223 = dma.hbm_to_vmem [thread:$0]  %s219, 256, %s221, [#allocation9]
        $region28: #{tpu_custom_call.1} parent=11 // pred_fallthru
          _
      $region12: #{tpu_custom_call.1} parent=5 // pred_fallthru
        _
      %p224 = scmp.lt.s32.totalorder %s19, 2
      // Predicated region
      $region29: #{tpu_custom_call.1} parent=5 // pred_check
        %p225 = pneg %p224
      $region30: #{tpu_custom_call.1} parent=5 // pred_check_branch
        %227 = sbr.rel (%p225) target = $region32
      $region31: #{tpu_custom_call.1} parent=5 // pred_region
        // Predicated region
        $region33: #{tpu_custom_call.1} parent=31 // pred_check
          %p228 = pneg %p39
        $region34: #{tpu_custom_call.1} parent=31 // pred_check_branch
          %230 = sbr.rel (%p228) target = $region36
        $region35: #{tpu_custom_call.1} parent=31 // pred_region
          %s231 = sand.u32 %s29, 1
          %s232 = scalar_lea.sflag [#allocation3], %s231
          %s233 = sand.u32 %s29, 1
          %s234 = smul.addr %s233, 64
          %s235 = scalar_lea.vmem [#allocation2], %s234
          %s236 = smul.u32 8, %s19
          %238 = vsyncadd %s232, 0
          %s239 = smul.addr %s236, 8
          %s240 = scalar_lea.hbm %s0, %s239
          %s241 = sshll.u32 %s240, 4
          %s242 = int_to_ptr.hbm [resolvable:$true] %s241
          %s243 = sshll.u32 %s235, 4
          %s244 = int_to_ptr.vmem [resolvable:$true] %s243
          %249 = dma.hbm_to_vmem [thread:$0]  %s242, 1024, %s244, %s232, 128, 128, 8
        $region36: #{tpu_custom_call.1} parent=31 // pred_fallthru
          _
      $region32: #{tpu_custom_call.1} parent=5 // pred_fallthru
        _
      %p250 = scmp.le.s32.totalorder 1, %s19
      %p251 = scmp.lt.s32.totalorder %s19, 3
      %p252 = pnand %p250, %p251
      %p253 = pneg %p252
      // Predicated region
      $region37: #{tpu_custom_call.1} parent=5 // pred_check
        _
      $region38: #{tpu_custom_call.1} parent=5 // pred_check_branch
        %255 = sbr.rel (%p252) target = $region40
      $region39: #{tpu_custom_call.1} parent=5 // pred_region
        %s256 = ssub.s32 %s19, 1
        %s257 = sand.u32 %s32, 1
        %s258 = scalar_lea.sflag [#allocation3], %s257
        %s259 = sand.u32 %s32, 1
        %s260 = smul.addr %s259, 64
        %s261 = scalar_lea.vmem [#allocation2], %s260
        // Predicated region
        $region41: #{tpu_custom_call.1} parent=39 // pred_check
          %p262 = pneg %p45
        $region42: #{tpu_custom_call.1} parent=39 // pred_check_branch
          %264 = sbr.rel (%p262) target = $region44
        $region43: #{tpu_custom_call.1} parent=39 // pred_region
          %266 = dma.done %s258, 1024
        $region44: #{tpu_custom_call.1} parent=39 // pred_fallthru
          _
        // Predicated region
        $region45: #{tpu_custom_call.1} parent=39 // pred_check
          %p267 = pneg %p66
        $region46: #{tpu_custom_call.1} parent=39 // pred_check_branch
          %269 = sbr.rel (%p267) target = $region48
        $region47: #{tpu_custom_call.1} parent=39 // pred_region
          %271 = dma.done [#allocation6], 4096
        $region48: #{tpu_custom_call.1} parent=39 // pred_fallthru
          _
        // Predicated region
        $region49: #{tpu_custom_call.1} parent=39 // pred_check
          %p272 = pneg %p87
        $region50: #{tpu_custom_call.1} parent=39 // pred_check_branch
          %274 = sbr.rel (%p272) target = $region52
        $region51: #{tpu_custom_call.1} parent=39 // pred_region
          %276 = dma.done [#allocation6], 1024
        $region52: #{tpu_custom_call.1} parent=39 // pred_fallthru
          _
        // Predicated region
        $region53: #{tpu_custom_call.1} parent=39 // pred_check
          %p277 = pneg %p108
        $region54: #{tpu_custom_call.1} parent=39 // pred_check_branch
          %279 = sbr.rel (%p277) target = $region56
        $region55: #{tpu_custom_call.1} parent=39 // pred_region
          %281 = dma.done [#allocation9], 4096
        $region56: #{tpu_custom_call.1} parent=39 // pred_fallthru
          _
        // Predicated region
        $region57: #{tpu_custom_call.1} parent=39 // pred_check
          %p282 = pneg %p129
        $region58: #{tpu_custom_call.1} parent=39 // pred_check_branch
          %284 = sbr.rel (%p282) target = $region60
        $region59: #{tpu_custom_call.1} parent=39 // pred_region
          %286 = dma.done [#allocation9], 256
        $region60: #{tpu_custom_call.1} parent=39 // pred_fallthru
          _
        %s287 = sand.u32 %s32, 1
        %s288 = scalar_lea.sflag [#allocation3], %s287
        %s289 = sand.u32 %s32, 1
        %s290 = smul.addr %s289, 64
        %s291 = scalar_lea.vmem [#allocation2], %s290
        %p292 = pneg %p45
        %p293 = pneg %p42
        %p294 = pneg %p66
        %p295 = pneg %p63
        %p296 = pneg %p87
        %p297 = pneg %p84
        %p298 = pneg %p108
        %p299 = pneg %p105
        %p300 = pneg %p129
        %p301 = pneg %p126
        %p302 = pneg %p155
        %p303 = pneg %p152
        %s304 = sand.u32 %s142, 1
        %s305 = scalar_lea.sflag [#allocation4], %s304
        %s306 = sand.u32 %s142, 1
        %s307 = smul.addr %s306, 64
        %s308 = scalar_lea.vmem [#allocation11], %s307
        %s309 = smul.u32 8, %s24
        %s310 = smul.u32 8, %s24
        %v311 = vld [vmem:[%s261] sm:$0xff]
        %v312 = vld [vmem:[%s261 + $0x8] sm:$0xff]
        %v313 = vld [vmem:[%s261 + $0x10] sm:$0xff]
        %v314 = vld [vmem:[%s261 + $0x18] sm:$0xff]
        %v315 = vld [vmem:[%s261 + $0x20] sm:$0xff]
        %v316 = vld [vmem:[%s261 + $0x28] sm:$0xff]
        %v317 = vld [vmem:[%s261 + $0x30] sm:$0xff]
        %v318 = vld [vmem:[%s261 + $0x38] sm:$0xff]
        %v319 = vpack.c.bf16 %v312, %v311
        %v320 = vpack.c.bf16 %v314, %v313
        %v321 = vpack.c.bf16 %v316, %v315
        %v322 = vpack.c.bf16 %v318, %v317
        %v323 = vld [vmem:[#allocation5] sm:$0xff]
        %v324 = vld [vmem:[#allocation5 + $0x8] sm:$0xff]
        %v325 = vld [vmem:[#allocation5 + $0x10] sm:$0xff]
        %v326 = vld [vmem:[#allocation5 + $0x18] sm:$0xff]
        %v327 = vld [vmem:[#allocation5 + $0x20] sm:$0xff]
        %v328 = vld [vmem:[#allocation5 + $0x28] sm:$0xff]
        %v329 = vld [vmem:[#allocation5 + $0x30] sm:$0xff]
        %v330 = vld [vmem:[#allocation5 + $0x38] sm:$0xff]
        %v331 = vld [vmem:[#allocation5 + $0x40] sm:$0xff]
        %v332 = vld [vmem:[#allocation5 + $0x48] sm:$0xff]
        %v333 = vld [vmem:[#allocation5 + $0x50] sm:$0xff]
        %v334 = vld [vmem:[#allocation5 + $0x58] sm:$0xff]
        %v335 = vld [vmem:[#allocation5 + $0x60] sm:$0xff]
        %v336 = vld [vmem:[#allocation5 + $0x68] sm:$0xff]
        %v337 = vld [vmem:[#allocation5 + $0x70] sm:$0xff]
        %v338 = vld [vmem:[#allocation5 + $0x78] sm:$0xff]
        %v339 = vld [vmem:[#allocation5 + $0x80] sm:$0xff]
        %v340 = vld [vmem:[#allocation5 + $0x88] sm:$0xff]
        %v341 = vld [vmem:[#allocation5 + $0x90] sm:$0xff]
        %v342 = vld [vmem:[#allocation5 + $0x98] sm:$0xff]
        %v343 = vld [vmem:[#allocation5 + $0xa0] sm:$0xff]
        %v344 = vld [vmem:[#allocation5 + $0xa8] sm:$0xff]
        %v345 = vld [vmem:[#allocation5 + $0xb0] sm:$0xff]
        %v346 = vld [vmem:[#allocation5 + $0xb8] sm:$0xff]
        %v347 = vld [vmem:[#allocation5 + $0xc0] sm:$0xff]
        %v348 = vld [vmem:[#allocation5 + $0xc8] sm:$0xff]
        %v349 = vld [vmem:[#allocation5 + $0xd0] sm:$0xff]
        %v350 = vld [vmem:[#allocation5 + $0xd8] sm:$0xff]
        %v351 = vld [vmem:[#allocation5 + $0xe0] sm:$0xff]
        %v352 = vld [vmem:[#allocation5 + $0xe8] sm:$0xff]
        %v353 = vld [vmem:[#allocation5 + $0xf0] sm:$0xff]
        %v354 = vld [vmem:[#allocation5 + $0xf8] sm:$0xff]
        %v355 = vld [vmem:[#allocation10] ss:$4 sm:$0xf]
        %v357 = vperm.slane %v355, 0
        %v358 = vperm.slane %v355, 1
        %v359 = vperm.slane %v355, 2
        %v360 = vperm.slane %v355, 3
        %v397 = vunpack.c.l.b16 %v323
        %v398 = vunpack.c.h.b16 %v323
        %v399 = vunpack.c.l.b16 %v324
        %v400 = vunpack.c.h.b16 %v324
        %v401 = vunpack.c.l.b16 %v325
        %v402 = vunpack.c.h.b16 %v325
        %v403 = vunpack.c.l.b16 %v326
        %v404 = vunpack.c.h.b16 %v326
        %v405 = vunpack.c.l.b16 %v327
        %v406 = vunpack.c.h.b16 %v327
        %v407 = vunpack.c.l.b16 %v328
        %v408 = vunpack.c.h.b16 %v328
        %v409 = vunpack.c.l.b16 %v329
        %v410 = vunpack.c.h.b16 %v329
        %v411 = vunpack.c.l.b16 %v330
        %v412 = vunpack.c.h.b16 %v330
        %v413 = vunpack.c.l.b16 %v331
        %v414 = vunpack.c.h.b16 %v331
        %v415 = vunpack.c.l.b16 %v332
        %v416 = vunpack.c.h.b16 %v332
        %v417 = vunpack.c.l.b16 %v333
        %v418 = vunpack.c.h.b16 %v333
        %v419 = vunpack.c.l.b16 %v334
        %v420 = vunpack.c.h.b16 %v334
        %v421 = vunpack.c.l.b16 %v335
        %v422 = vunpack.c.h.b16 %v335
        %v423 = vunpack.c.l.b16 %v336
        %v424 = vunpack.c.h.b16 %v336
        %v425 = vunpack.c.l.b16 %v337
        %v426 = vunpack.c.h.b16 %v337
        %v427 = vunpack.c.l.b16 %v338
        %v428 = vunpack.c.h.b16 %v338
        %v429 = vunpack.c.l.b16 %v339
        %v430 = vunpack.c.h.b16 %v339
        %v431 = vunpack.c.l.b16 %v340
        %v432 = vunpack.c.h.b16 %v340
        %v433 = vunpack.c.l.b16 %v341
        %v434 = vunpack.c.h.b16 %v341
        %v435 = vunpack.c.l.b16 %v342
        %v436 = vunpack.c.h.b16 %v342
        %v437 = vunpack.c.l.b16 %v343
        %v438 = vunpack.c.h.b16 %v343
        %v439 = vunpack.c.l.b16 %v344
        %v440 = vunpack.c.h.b16 %v344
        %v441 = vunpack.c.l.b16 %v345
        %v442 = vunpack.c.h.b16 %v345
        %v443 = vunpack.c.l.b16 %v346
        %v444 = vunpack.c.h.b16 %v346
        %v445 = vunpack.c.l.b16 %v347
        %v446 = vunpack.c.h.b16 %v347
        %v447 = vunpack.c.l.b16 %v348
        %v448 = vunpack.c.h.b16 %v348
        %v449 = vunpack.c.l.b16 %v349
        %v450 = vunpack.c.h.b16 %v349
        %v451 = vunpack.c.l.b16 %v350
        %v452 = vunpack.c.h.b16 %v350
        %v453 = vunpack.c.l.b16 %v351
        %v454 = vunpack.c.h.b16 %v351
        %v455 = vunpack.c.l.b16 %v352
        %v456 = vunpack.c.h.b16 %v352
        %v457 = vunpack.c.l.b16 %v353
        %v458 = vunpack.c.h.b16 %v353
        %v459 = vunpack.c.l.b16 %v354
        %v460 = vunpack.c.h.b16 %v354
        %v461 = vpack.c.b16 %v401, %v397
        %v462 = vpack.c.b16 %v402, %v398
        %v463 = vpack.c.b16 %v403, %v399
        %v464 = vpack.c.b16 %v404, %v400
        %v465 = vpack.c.b16 %v409, %v405
        %v466 = vpack.c.b16 %v410, %v406
        %v467 = vpack.c.b16 %v411, %v407
        %v468 = vpack.c.b16 %v412, %v408
        %v469 = vpack.c.b16 %v417, %v413
        %v470 = vpack.c.b16 %v418, %v414
        %v471 = vpack.c.b16 %v419, %v415
        %v472 = vpack.c.b16 %v420, %v416
        %v473 = vpack.c.b16 %v425, %v421
        %v474 = vpack.c.b16 %v426, %v422
        %v475 = vpack.c.b16 %v427, %v423
        %v476 = vpack.c.b16 %v428, %v424
        %v477 = vpack.c.b16 %v433, %v429
        %v478 = vpack.c.b16 %v434, %v430
        %v479 = vpack.c.b16 %v435, %v431
        %v480 = vpack.c.b16 %v436, %v432
        %v481 = vpack.c.b16 %v441, %v437
        %v482 = vpack.c.b16 %v442, %v438
        %v483 = vpack.c.b16 %v443, %v439
        %v484 = vpack.c.b16 %v444, %v440
        %v485 = vpack.c.b16 %v449, %v445
        %v486 = vpack.c.b16 %v450, %v446
        %v487 = vpack.c.b16 %v451, %v447
        %v488 = vpack.c.b16 %v452, %v448
        %v489 = vpack.c.b16 %v457, %v453
        %v490 = vpack.c.b16 %v458, %v454
        %v491 = vpack.c.b16 %v459, %v455
        %v492 = vpack.c.b16 %v460, %v456
        %525 = vmatpush.bf16.msra.mxu0 %v489
        %526 = vmatpush.bf16.msra.mxu0 %v485
        %527 = vmatpush.bf16.msra.mxu0 %v481
        %528 = vmatpush.bf16.msra.mxu0 %v477
        %529 = vmatpush.bf16.msra.mxu0 %v473
        %530 = vmatpush.bf16.msra.mxu0 %v469
        %531 = vmatpush.bf16.msra.mxu0 %v465
        %532 = vmatpush.bf16.msra.mxu0 %v461
        %533 = vmatmul.bf16.gmra.mxu0 %v319
        %v534 = vpop.f32.mrf.mxu0
        %v535 = vadd.f32 %v357, %v534
        %v536 = vpop.f32.mrf.mxu0
        %v537 = vadd.f32 %v357, %v536
        %538 = vmatmul.bf16.gmra.mxu0 %v320
        %v539 = vpop.f32.mrf.mxu0
        %v540 = vadd.f32 %v357, %v539
        %v541 = vpop.f32.mrf.mxu0
        %v542 = vadd.f32 %v357, %v541
        %543 = vmatmul.bf16.gmra.mxu0 %v321
        %v544 = vpop.f32.mrf.mxu0
        %v545 = vadd.f32 %v357, %v544
        %v546 = vpop.f32.mrf.mxu0
        %v547 = vadd.f32 %v357, %v546
        %548 = vmatmul.bf16.gmra.mxu0 %v322
        %v549 = vpop.f32.mrf.mxu0
        %v550 = vadd.f32 %v357, %v549
        %v551 = vpop.f32.mrf.mxu0
        %v552 = vadd.f32 %v357, %v551
        %553 = vdwg.mxu0
        %554 = vmatpush.bf16.msra.mxu0 %v490
        %555 = vmatpush.bf16.msra.mxu0 %v486
        %556 = vmatpush.bf16.msra.mxu0 %v482
        %557 = vmatpush.bf16.msra.mxu0 %v478
        %558 = vmatpush.bf16.msra.mxu0 %v474
        %559 = vmatpush.bf16.msra.mxu0 %v470
        %560 = vmatpush.bf16.msra.mxu0 %v466
        %561 = vmatpush.bf16.msra.mxu0 %v462
        %562 = vmatmul.bf16.gmra.mxu0 %v319
        %v563 = vpop.f32.mrf.mxu0
        %v564 = vadd.f32 %v358, %v563
        %v565 = vpop.f32.mrf.mxu0
        %v566 = vadd.f32 %v358, %v565
        %567 = vmatmul.bf16.gmra.mxu0 %v320
        %v568 = vpop.f32.mrf.mxu0
        %v569 = vadd.f32 %v358, %v568
        %v570 = vpop.f32.mrf.mxu0
        %v571 = vadd.f32 %v358, %v570
        %572 = vmatmul.bf16.gmra.mxu0 %v321
        %v573 = vpop.f32.mrf.mxu0
        %v574 = vadd.f32 %v358, %v573
        %v575 = vpop.f32.mrf.mxu0
        %v576 = vadd.f32 %v358, %v575
        %577 = vmatmul.bf16.gmra.mxu0 %v322
        %v578 = vpop.f32.mrf.mxu0
        %v579 = vadd.f32 %v358, %v578
        %v580 = vpop.f32.mrf.mxu0
        %v581 = vadd.f32 %v358, %v580
        %582 = vdwg.mxu0
        %583 = vmatpush.bf16.msra.mxu0 %v491
        %584 = vmatpush.bf16.msra.mxu0 %v487
        %585 = vmatpush.bf16.msra.mxu0 %v483
        %586 = vmatpush.bf16.msra.mxu0 %v479
        %587 = vmatpush.bf16.msra.mxu0 %v475
        %588 = vmatpush.bf16.msra.mxu0 %v471
        %589 = vmatpush.bf16.msra.mxu0 %v467
        %590 = vmatpush.bf16.msra.mxu0 %v463
        %591 = vmatmul.bf16.gmra.mxu0 %v319
        %v592 = vpop.f32.mrf.mxu0
        %v593 = vadd.f32 %v359, %v592
        %v594 = vpop.f32.mrf.mxu0
        %v595 = vadd.f32 %v359, %v594
        %596 = vmatmul.bf16.gmra.mxu0 %v320
        %v597 = vpop.f32.mrf.mxu0
        %v598 = vadd.f32 %v359, %v597
        %v599 = vpop.f32.mrf.mxu0
        %v600 = vadd.f32 %v359, %v599
        %601 = vmatmul.bf16.gmra.mxu0 %v321
        %v602 = vpop.f32.mrf.mxu0
        %v603 = vadd.f32 %v359, %v602
        %v604 = vpop.f32.mrf.mxu0
        %v605 = vadd.f32 %v359, %v604
        %606 = vmatmul.bf16.gmra.mxu0 %v322
        %v607 = vpop.f32.mrf.mxu0
        %v608 = vadd.f32 %v359, %v607
        %v609 = vpop.f32.mrf.mxu0
        %v610 = vadd.f32 %v359, %v609
        %611 = vdwg.mxu0
        %612 = vmatpush.bf16.msra.mxu0 %v492
        %613 = vmatpush.bf16.msra.mxu0 %v488
        %614 = vmatpush.bf16.msra.mxu0 %v484
        %615 = vmatpush.bf16.msra.mxu0 %v480
        %616 = vmatpush.bf16.msra.mxu0 %v476
        %617 = vmatpush.bf16.msra.mxu0 %v472
        %618 = vmatpush.bf16.msra.mxu0 %v468
        %619 = vmatpush.bf16.msra.mxu0 %v464
        %620 = vmatmul.bf16.gmra.mxu0 %v319
        %v621 = vpop.f32.mrf.mxu0
        %v622 = vadd.f32 %v360, %v621
        %v623 = vpop.f32.mrf.mxu0
        %v624 = vadd.f32 %v360, %v623
        %625 = vmatmul.bf16.gmra.mxu0 %v320
        %v626 = vpop.f32.mrf.mxu0
        %v627 = vadd.f32 %v360, %v626
        %v628 = vpop.f32.mrf.mxu0
        %v629 = vadd.f32 %v360, %v628
        %630 = vmatmul.bf16.gmra.mxu0 %v321
        %v631 = vpop.f32.mrf.mxu0
        %v632 = vadd.f32 %v360, %v631
        %v633 = vpop.f32.mrf.mxu0
        %v634 = vadd.f32 %v360, %v633
        %635 = vmatmul.bf16.gmra.mxu0 %v322
        %v636 = vpop.f32.mrf.mxu0
        %v637 = vadd.f32 %v360, %v636
        %v638 = vpop.f32.mrf.mxu0
        %v639 = vadd.f32 %v360, %v638
        %640 = vdwg.mxu0
        %v641 = vmax.f32 %v535, 0.0
        %v642 = vmax.f32 %v564, 0.0
        %v643 = vmax.f32 %v593, 0.0
        %v644 = vmax.f32 %v622, 0.0
        %v645 = vmax.f32 %v537, 0.0
        %v646 = vmax.f32 %v566, 0.0
        %v647 = vmax.f32 %v595, 0.0
        %v648 = vmax.f32 %v624, 0.0
        %v649 = vmax.f32 %v540, 0.0
        %v650 = vmax.f32 %v569, 0.0
        %v651 = vmax.f32 %v598, 0.0
        %v652 = vmax.f32 %v627, 0.0
        %v653 = vmax.f32 %v542, 0.0
        %v654 = vmax.f32 %v571, 0.0
        %v655 = vmax.f32 %v600, 0.0
        %v656 = vmax.f32 %v629, 0.0
        %v657 = vmax.f32 %v545, 0.0
        %v658 = vmax.f32 %v574, 0.0
        %v659 = vmax.f32 %v603, 0.0
        %v660 = vmax.f32 %v632, 0.0
        %v661 = vmax.f32 %v547, 0.0
        %v662 = vmax.f32 %v576, 0.0
        %v663 = vmax.f32 %v605, 0.0
        %v664 = vmax.f32 %v634, 0.0
        %v665 = vmax.f32 %v550, 0.0
        %v666 = vmax.f32 %v579, 0.0
        %v667 = vmax.f32 %v608, 0.0
        %v668 = vmax.f32 %v637, 0.0
        %v669 = vmax.f32 %v552, 0.0
        %v670 = vmax.f32 %v581, 0.0
        %v671 = vmax.f32 %v610, 0.0
        %v672 = vmax.f32 %v639, 0.0
        %v673 = vmin.f32 %v641, 6.0
        %v674 = vmin.f32 %v642, 6.0
        %v675 = vmin.f32 %v643, 6.0
        %v676 = vmin.f32 %v644, 6.0
        %v677 = vmin.f32 %v645, 6.0
        %v678 = vmin.f32 %v646, 6.0
        %v679 = vmin.f32 %v647, 6.0
        %v680 = vmin.f32 %v648, 6.0
        %v681 = vmin.f32 %v649, 6.0
        %v682 = vmin.f32 %v650, 6.0
        %v683 = vmin.f32 %v651, 6.0
        %v684 = vmin.f32 %v652, 6.0
        %v685 = vmin.f32 %v653, 6.0
        %v686 = vmin.f32 %v654, 6.0
        %v687 = vmin.f32 %v655, 6.0
        %v688 = vmin.f32 %v656, 6.0
        %v689 = vmin.f32 %v657, 6.0
        %v690 = vmin.f32 %v658, 6.0
        %v691 = vmin.f32 %v659, 6.0
        %v692 = vmin.f32 %v660, 6.0
        %v693 = vmin.f32 %v661, 6.0
        %v694 = vmin.f32 %v662, 6.0
        %v695 = vmin.f32 %v663, 6.0
        %v696 = vmin.f32 %v664, 6.0
        %v697 = vmin.f32 %v665, 6.0
        %v698 = vmin.f32 %v666, 6.0
        %v699 = vmin.f32 %v667, 6.0
        %v700 = vmin.f32 %v668, 6.0
        %v701 = vmin.f32 %v669, 6.0
        %v702 = vmin.f32 %v670, 6.0
        %v703 = vmin.f32 %v671, 6.0
        %v704 = vmin.f32 %v672, 6.0
        %v705 = vld [vmem:[#allocation7] sm:$0xff]
        %v706 = vld [vmem:[#allocation7 + $0x8] sm:$0xff]
        %v707 = vld [vmem:[#allocation7 + $0x10] sm:$0xff]
        %v708 = vld [vmem:[#allocation7 + $0x18] sm:$0xff]
        %v709 = vld [vmem:[#allocation7 + $0x20] sm:$0x1]
        %v710 = vld [vmem:[#allocation7 + $0x28] sm:$0x1]
        %v711 = vld [vmem:[#allocation7 + $0x30] sm:$0x1]
        %v712 = vld [vmem:[#allocation7 + $0x38] sm:$0x1]
        %v713 = vlaneseq
        %v714 = vshrl.u32 %v713, 7
        %v715 = vadd.s32 %v714, 8
        %v716 = vadd.s32 %v714, 16
        %v717 = vadd.s32 %v714, 24
        %v718 = vadd.s32 %v714, 32
        %v719 = vadd.s32 %v714, 40
        %v720 = vadd.s32 %v714, 48
        %v721 = vadd.s32 %v714, 56
        %vm722 = vcmp.lt.s32.totalorder %v714, 0
        %v723 = vsub.s32 0, %v714
        %v724 = vsel %vm722, %v723, %v714
        %v725 = vshrl.u32 %v724, 4
        %v726 = vand.u32 %v724, 15
        %v727 = vsub.s32 0, %v726
        %v728 = vsel %vm722, %v727, %v726
        %vm729 = vcmp.lt.s32.totalorder %v715, 0
        %v730 = vsub.s32 0, %v715
        %v731 = vsel %vm729, %v730, %v715
        %v732 = vshrl.u32 %v731, 4
        %v733 = vand.u32 %v731, 15
        %v734 = vsub.s32 0, %v733
        %v735 = vsel %vm729, %v734, %v733
        %vm736 = vcmp.lt.s32.totalorder %v716, 0
        %v737 = vsub.s32 0, %v716
        %v738 = vsel %vm736, %v737, %v716
        %v739 = vshrl.u32 %v738, 4
        %v740 = vand.u32 %v738, 15
        %v741 = vsub.s32 0, %v740
        %v742 = vsel %vm736, %v741, %v740
        %vm743 = vcmp.lt.s32.totalorder %v717, 0
        %v744 = vsub.s32 0, %v717
        %v745 = vsel %vm743, %v744, %v717
        %v746 = vshrl.u32 %v745, 4
        %v747 = vand.u32 %v745, 15
        %v748 = vsub.s32 0, %v747
        %v749 = vsel %vm743, %v748, %v747
        %vm750 = vcmp.lt.s32.totalorder %v718, 0
        %v751 = vsub.s32 0, %v718
        %v752 = vsel %vm750, %v751, %v718
        %v753 = vshrl.u32 %v752, 4
        %v754 = vand.u32 %v752, 15
        %v755 = vsub.s32 0, %v754
        %v756 = vsel %vm750, %v755, %v754
        %vm757 = vcmp.lt.s32.totalorder %v719, 0
        %v758 = vsub.s32 0, %v719
        %v759 = vsel %vm757, %v758, %v719
        %v760 = vshrl.u32 %v759, 4
        %v761 = vand.u32 %v759, 15
        %v762 = vsub.s32 0, %v761
        %v763 = vsel %vm757, %v762, %v761
        %vm764 = vcmp.lt.s32.totalorder %v720, 0
        %v765 = vsub.s32 0, %v720
        %v766 = vsel %vm764, %v765, %v720
        %v767 = vshrl.u32 %v766, 4
        %v768 = vand.u32 %v766, 15
        %v769 = vsub.s32 0, %v768
        %v770 = vsel %vm764, %v769, %v768
        %vm771 = vcmp.lt.s32.totalorder %v721, 0
        %v772 = vsub.s32 0, %v721
        %v773 = vsel %vm771, %v772, %v721
        %v774 = vshrl.u32 %v773, 4
        %v775 = vand.u32 %v773, 15
        %v776 = vsub.s32 0, %v775
        %v777 = vsel %vm771, %v776, %v775
        %vm778 = vcmp.ne.s32.totalorder %v728, 0
        %vm779 = vcmp.ne.s32.totalorder %v735, 0
        %vm780 = vcmp.ne.s32.totalorder %v742, 0
        %vm781 = vcmp.ne.s32.totalorder %v749, 0
        %vm782 = vcmp.ne.s32.totalorder %v756, 0
        %vm783 = vcmp.ne.s32.totalorder %v763, 0
        %vm784 = vcmp.ne.s32.totalorder %v770, 0
        %vm785 = vcmp.ne.s32.totalorder %v777, 0
        %vm786 = vcmp.lt.s32.totalorder %v728, 0
        %vm787 = vcmp.lt.s32.totalorder %v735, 0
        %vm788 = vcmp.lt.s32.totalorder %v742, 0
        %vm789 = vcmp.lt.s32.totalorder %v749, 0
        %vm790 = vcmp.lt.s32.totalorder %v756, 0
        %vm791 = vcmp.lt.s32.totalorder %v763, 0
        %vm792 = vcmp.lt.s32.totalorder %v770, 0
        %vm793 = vcmp.lt.s32.totalorder %v777, 0
        %vm794 = vmand %vm786, %vm778
        %vm795 = vmand %vm787, %vm779
        %vm796 = vmand %vm788, %vm780
        %vm797 = vmand %vm789, %vm781
        %vm798 = vmand %vm790, %vm782
        %vm799 = vmand %vm791, %vm783
        %vm800 = vmand %vm792, %vm784
        %vm801 = vmand %vm793, %vm785
        %v802 = vadd.s32 %v728, 16
        %v803 = vadd.s32 %v735, 16
        %v804 = vadd.s32 %v742, 16
        %v805 = vadd.s32 %v749, 16
        %v806 = vadd.s32 %v756, 16
        %v807 = vadd.s32 %v763, 16
        %v808 = vadd.s32 %v770, 16
        %v809 = vadd.s32 %v777, 16
        %v810 = vsel %vm794, %v802, %v728
        %v811 = vsel %vm795, %v803, %v735
        %v812 = vsel %vm796, %v804, %v742
        %v813 = vsel %vm797, %v805, %v749
        %v814 = vsel %vm798, %v806, %v756
        %v815 = vsel %vm799, %v807, %v763
        %v816 = vsel %vm800, %v808, %v770
        %v817 = vsel %vm801, %v809, %v777
        %vm818 = vcmp.ge.s32.totalorder %v810, 1
        %vm819 = vcmp.ge.s32.totalorder %v811, 1
        %vm820 = vcmp.ge.s32.totalorder %v812, 1
        %vm821 = vcmp.ge.s32.totalorder %v813, 1
        %vm822 = vcmp.ge.s32.totalorder %v814, 1
        %vm823 = vcmp.ge.s32.totalorder %v815, 1
        %vm824 = vcmp.ge.s32.totalorder %v816, 1
        %vm825 = vcmp.ge.s32.totalorder %v817, 1
        %v826 = vrot.slane %v673, 7
        %v827 = vrot.slane %v674, 7
        %v828 = vrot.slane %v675, 7
        %v829 = vrot.slane %v676, 7
        %v830 = vrot.slane %v677, 7
        %v831 = vrot.slane %v678, 7
        %v832 = vrot.slane %v679, 7
        %v833 = vrot.slane %v680, 7
        %v834 = vrot.slane %v681, 7
        %v835 = vrot.slane %v682, 7
        %v836 = vrot.slane %v683, 7
        %v837 = vrot.slane %v684, 7
        %v838 = vrot.slane %v685, 7
        %v839 = vrot.slane %v686, 7
        %v840 = vrot.slane %v687, 7
        %v841 = vrot.slane %v688, 7
        %v842 = vrot.slane %v689, 7
        %v843 = vrot.slane %v690, 7
        %v844 = vrot.slane %v691, 7
        %v845 = vrot.slane %v692, 7
        %v846 = vrot.slane %v693, 7
        %v847 = vrot.slane %v694, 7
        %v848 = vrot.slane %v695, 7
        %v849 = vrot.slane %v696, 7
        %v850 = vrot.slane %v697, 7
        %v851 = vrot.slane %v698, 7
        %v852 = vrot.slane %v699, 7
        %v853 = vrot.slane %v700, 7
        %v854 = vrot.slane %v701, 7
        %v855 = vrot.slane %v702, 7
        %v856 = vrot.slane %v703, 7
        %v857 = vrot.slane %v704, 7
        %vm858 = vcmp.lt.s32.totalorder %v714, 1
        %v859 = vsel %vm858, %v850, %v854
        %v860 = vsel %vm858, %v851, %v855
        %v861 = vsel %vm858, %v852, %v856
        %v862 = vsel %vm858, %v853, %v857
        %v863 = vsel %vm858, %v846, %v850
        %v864 = vsel %vm858, %v847, %v851
        %v865 = vsel %vm858, %v848, %v852
        %v866 = vsel %vm858, %v849, %v853
        %v867 = vsel %vm858, %v842, %v846
        %v868 = vsel %vm858, %v843, %v847
        %v869 = vsel %vm858, %v844, %v848
        %v870 = vsel %vm858, %v845, %v849
        %v871 = vsel %vm858, %v838, %v842
        %v872 = vsel %vm858, %v839, %v843
        %v873 = vsel %vm858, %v840, %v844
        %v874 = vsel %vm858, %v841, %v845
        %v875 = vsel %vm858, %v834, %v838
        %v876 = vsel %vm858, %v835, %v839
        %v877 = vsel %vm858, %v836, %v840
        %v878 = vsel %vm858, %v837, %v841
        %v879 = vsel %vm858, %v830, %v834
        %v880 = vsel %vm858, %v831, %v835
        %v881 = vsel %vm858, %v832, %v836
        %v882 = vsel %vm858, %v833, %v837
        %v883 = vsel %vm858, %v826, %v830
        %v884 = vsel %vm858, %v827, %v831
        %v885 = vsel %vm858, %v828, %v832
        %v886 = vsel %vm858, %v829, %v833
        %v887 = vsel %vm858, %v854, %v826
        %v888 = vsel %vm858, %v855, %v827
        %v889 = vsel %vm858, %v856, %v828
        %v890 = vsel %vm858, %v857, %v829
        %v891 = vsel %vm818, 1, 0
        %v892 = vsel %vm819, 1, 0
        %v893 = vsel %vm820, 1, 0
        %v894 = vsel %vm821, 1, 0
        %v895 = vsel %vm822, 1, 0
        %v896 = vsel %vm823, 1, 0
        %v897 = vsel %vm824, 1, 0
        %v898 = vsel %vm825, 1, 0
        %vm899 = vcmp.eq.s32.totalorder %v891, 1
        %vm900 = vcmp.eq.s32.totalorder %v892, 1
        %vm901 = vcmp.eq.s32.totalorder %v893, 1
        %vm902 = vcmp.eq.s32.totalorder %v894, 1
        %vm903 = vcmp.eq.s32.totalorder %v895, 1
        %vm904 = vcmp.eq.s32.totalorder %v896, 1
        %vm905 = vcmp.eq.s32.totalorder %v897, 1
        %vm906 = vcmp.eq.s32.totalorder %v898, 1
        %v907 = vsel %vm899, %v887, 0.0
        %v908 = vsel %vm899, %v888, 0.0
        %v909 = vsel %vm899, %v889, 0.0
        %v910 = vsel %vm899, %v890, 0.0
        %v911 = vsel %vm900, %v883, 0.0
        %v912 = vsel %vm900, %v884, 0.0
        %v913 = vsel %vm900, %v885, 0.0
        %v914 = vsel %vm900, %v886, 0.0
        %v915 = vsel %vm901, %v879, 0.0
        %v916 = vsel %vm901, %v880, 0.0
        %v917 = vsel %vm901, %v881, 0.0
        %v918 = vsel %vm901, %v882, 0.0
        %v919 = vsel %vm902, %v875, 0.0
        %v920 = vsel %vm902, %v876, 0.0
        %v921 = vsel %vm902, %v877, 0.0
        %v922 = vsel %vm902, %v878, 0.0
        %v923 = vsel %vm903, %v871, 0.0
        %v924 = vsel %vm903, %v872, 0.0
        %v925 = vsel %vm903, %v873, 0.0
        %v926 = vsel %vm903, %v874, 0.0
        %v927 = vsel %vm904, %v867, 0.0
        %v928 = vsel %vm904, %v868, 0.0
        %v929 = vsel %vm904, %v869, 0.0
        %v930 = vsel %vm904, %v870, 0.0
        %v931 = vsel %vm905, %v863, 0.0
        %v932 = vsel %vm905, %v864, 0.0
        %v933 = vsel %vm905, %v865, 0.0
        %v934 = vsel %vm905, %v866, 0.0
        %v935 = vsel %vm906, %v859, 0.0
        %v936 = vsel %vm906, %v860, 0.0
        %v937 = vsel %vm906, %v861, 0.0
        %v938 = vsel %vm906, %v862, 0.0
        %939 = vrot.lane.b32.xlu0 %v907, 32
        %v940 = vpop.permute.xlu0 %939
        %941 = vrot.lane.b32.xlu0 %v911, 32
        %v942 = vpop.permute.xlu0 %941
        %943 = vrot.lane.b32.xlu0 %v915, 32
        %v944 = vpop.permute.xlu0 %943
        %945 = vrot.lane.b32.xlu0 %v919, 32
        %v946 = vpop.permute.xlu0 %945
        %947 = vrot.lane.b32.xlu0 %v923, 32
        %v948 = vpop.permute.xlu0 %947
        %949 = vrot.lane.b32.xlu0 %v927, 32
        %v950 = vpop.permute.xlu0 %949
        %951 = vrot.lane.b32.xlu0 %v931, 32
        %v952 = vpop.permute.xlu0 %951
        %953 = vrot.lane.b32.xlu0 %v935, 32
        %v954 = vpop.permute.xlu0 %953
        %955 = vrot.lane.b32.xlu0 %v908, 32
        %v956 = vpop.permute.xlu0 %955
        %957 = vrot.lane.b32.xlu0 %v912, 32
        %v958 = vpop.permute.xlu0 %957
        %959 = vrot.lane.b32.xlu0 %v916, 32
        %v960 = vpop.permute.xlu0 %959
        %961 = vrot.lane.b32.xlu0 %v920, 32
        %v962 = vpop.permute.xlu0 %961
        %963 = vrot.lane.b32.xlu0 %v924, 32
        %v964 = vpop.permute.xlu0 %963
        %965 = vrot.lane.b32.xlu0 %v928, 32
        %v966 = vpop.permute.xlu0 %965
        %967 = vrot.lane.b32.xlu0 %v932, 32
        %v968 = vpop.permute.xlu0 %967
        %969 = vrot.lane.b32.xlu0 %v936, 32
        %v970 = vpop.permute.xlu0 %969
        %971 = vrot.lane.b32.xlu0 %v909, 32
        %v972 = vpop.permute.xlu0 %971
        %973 = vrot.lane.b32.xlu0 %v913, 32
        %v974 = vpop.permute.xlu0 %973
        %975 = vrot.lane.b32.xlu0 %v917, 32
        %v976 = vpop.permute.xlu0 %975
        %977 = vrot.lane.b32.xlu0 %v921, 32
        %v978 = vpop.permute.xlu0 %977
        %979 = vrot.lane.b32.xlu0 %v925, 32
        %v980 = vpop.permute.xlu0 %979
        %981 = vrot.lane.b32.xlu0 %v929, 32
        %v982 = vpop.permute.xlu0 %981
        %983 = vrot.lane.b32.xlu0 %v933, 32
        %v984 = vpop.permute.xlu0 %983
        %985 = vrot.lane.b32.xlu0 %v937, 32
        %v986 = vpop.permute.xlu0 %985
        %987 = vrot.lane.b32.xlu0 %v910, 32
        %v988 = vpop.permute.xlu0 %987
        %989 = vrot.lane.b32.xlu0 %v914, 32
        %v990 = vpop.permute.xlu0 %989
        %991 = vrot.lane.b32.xlu0 %v918, 32
        %v992 = vpop.permute.xlu0 %991
        %993 = vrot.lane.b32.xlu0 %v922, 32
        %v994 = vpop.permute.xlu0 %993
        %995 = vrot.lane.b32.xlu0 %v926, 32
        %v996 = vpop.permute.xlu0 %995
        %997 = vrot.lane.b32.xlu0 %v930, 32
        %v998 = vpop.permute.xlu0 %997
        %999 = vrot.lane.b32.xlu0 %v934, 32
        %v1000 = vpop.permute.xlu0 %999
        %1001 = vrot.lane.b32.xlu0 %v938, 32
        %v1002 = vpop.permute.xlu0 %1001
        %v1003 = vlaneseq
        %v1004 = vand.u32 %v1003, 127
        %vm1005 = vcmp.lt.s32.totalorder %v1004, 32
        %v1006 = vsel %vm1005, %v972, %v988
        %v1007 = vsel %vm1005, %v974, %v990
        %v1008 = vsel %vm1005, %v976, %v992
        %v1009 = vsel %vm1005, %v978, %v994
        %v1010 = vsel %vm1005, %v980, %v996
        %v1011 = vsel %vm1005, %v982, %v998
        %v1012 = vsel %vm1005, %v984, %v1000
        %v1013 = vsel %vm1005, %v986, %v1002
        %v1014 = vsel %vm1005, %v956, %v972
        %v1015 = vsel %vm1005, %v958, %v974
        %v1016 = vsel %vm1005, %v960, %v976
        %v1017 = vsel %vm1005, %v962, %v978
        %v1018 = vsel %vm1005, %v964, %v980
        %v1019 = vsel %vm1005, %v966, %v982
        %v1020 = vsel %vm1005, %v968, %v984
        %v1021 = vsel %vm1005, %v970, %v986
        %v1022 = vsel %vm1005, %v940, %v956
        %v1023 = vsel %vm1005, %v942, %v958
        %v1024 = vsel %vm1005, %v944, %v960
        %v1025 = vsel %vm1005, %v946, %v962
        %v1026 = vsel %vm1005, %v948, %v964
        %v1027 = vsel %vm1005, %v950, %v966
        %v1028 = vsel %vm1005, %v952, %v968
        %v1029 = vsel %vm1005, %v954, %v970
        %v1030 = vsel %vm1005, %v988, %v940
        %v1031 = vsel %vm1005, %v990, %v942
        %v1032 = vsel %vm1005, %v992, %v944
        %v1033 = vsel %vm1005, %v994, %v946
        %v1034 = vsel %vm1005, %v996, %v948
        %v1035 = vsel %vm1005, %v998, %v950
        %v1036 = vsel %vm1005, %v1000, %v952
        %v1037 = vsel %vm1005, %v1002, %v954
        %v1038 = vperm.slane %v705, 0
        %v1039 = vperm.slane %v706, 0
        %v1040 = vperm.slane %v707, 0
        %v1041 = vperm.slane %v708, 0
        %v1042 = vmul.f32 %v1030, %v1038
        %v1043 = vmul.f32 %v1022, %v1039
        %v1044 = vmul.f32 %v1014, %v1040
        %v1045 = vmul.f32 %v1006, %v1041
        %v1046 = vmul.f32 %v1031, %v1038
        %v1047 = vmul.f32 %v1023, %v1039
        %v1048 = vmul.f32 %v1015, %v1040
        %v1049 = vmul.f32 %v1007, %v1041
        %v1050 = vmul.f32 %v1032, %v1038
        %v1051 = vmul.f32 %v1024, %v1039
        %v1052 = vmul.f32 %v1016, %v1040
        %v1053 = vmul.f32 %v1008, %v1041
        %v1054 = vmul.f32 %v1033, %v1038
        %v1055 = vmul.f32 %v1025, %v1039
        %v1056 = vmul.f32 %v1017, %v1040
        %v1057 = vmul.f32 %v1009, %v1041
        %v1058 = vmul.f32 %v1034, %v1038
        %v1059 = vmul.f32 %v1026, %v1039
        %v1060 = vmul.f32 %v1018, %v1040
        %v1061 = vmul.f32 %v1010, %v1041
        %v1062 = vmul.f32 %v1035, %v1038
        %v1063 = vmul.f32 %v1027, %v1039
        %v1064 = vmul.f32 %v1019, %v1040
        %v1065 = vmul.f32 %v1011, %v1041
        %v1066 = vmul.f32 %v1036, %v1038
        %v1067 = vmul.f32 %v1028, %v1039
        %v1068 = vmul.f32 %v1020, %v1040
        %v1069 = vmul.f32 %v1012, %v1041
        %v1070 = vmul.f32 %v1037, %v1038
        %v1071 = vmul.f32 %v1029, %v1039
        %v1072 = vmul.f32 %v1021, %v1040
        %v1073 = vmul.f32 %v1013, %v1041
        %v1074 = vadd.f32 %v1042, 0.0
        %v1075 = vadd.f32 %v1043, 0.0
        %v1076 = vadd.f32 %v1044, 0.0
        %v1077 = vadd.f32 %v1045, 0.0
        %v1078 = vadd.f32 %v1046, 0.0
        %v1079 = vadd.f32 %v1047, 0.0
        %v1080 = vadd.f32 %v1048, 0.0
        %v1081 = vadd.f32 %v1049, 0.0
        %v1082 = vadd.f32 %v1050, 0.0
        %v1083 = vadd.f32 %v1051, 0.0
        %v1084 = vadd.f32 %v1052, 0.0
        %v1085 = vadd.f32 %v1053, 0.0
        %v1086 = vadd.f32 %v1054, 0.0
        %v1087 = vadd.f32 %v1055, 0.0
        %v1088 = vadd.f32 %v1056, 0.0
        %v1089 = vadd.f32 %v1057, 0.0
        %v1090 = vadd.f32 %v1058, 0.0
        %v1091 = vadd.f32 %v1059, 0.0
        %v1092 = vadd.f32 %v1060, 0.0
        %v1093 = vadd.f32 %v1061, 0.0
        %v1094 = vadd.f32 %v1062, 0.0
        %v1095 = vadd.f32 %v1063, 0.0
        %v1096 = vadd.f32 %v1064, 0.0
        %v1097 = vadd.f32 %v1065, 0.0
        %v1098 = vadd.f32 %v1066, 0.0
        %v1099 = vadd.f32 %v1067, 0.0
        %v1100 = vadd.f32 %v1068, 0.0
        %v1101 = vadd.f32 %v1069, 0.0
        %v1102 = vadd.f32 %v1070, 0.0
        %v1103 = vadd.f32 %v1071, 0.0
        %v1104 = vadd.f32 %v1072, 0.0
        %v1105 = vadd.f32 %v1073, 0.0
        %v1106 = vperm.slane %v705, 1
        %v1107 = vperm.slane %v706, 1
        %v1108 = vperm.slane %v707, 1
        %v1109 = vperm.slane %v708, 1
        %v1110 = vmul.f32 %v907, %v1106
        %v1111 = vmul.f32 %v908, %v1107
        %v1112 = vmul.f32 %v909, %v1108
        %v1113 = vmul.f32 %v910, %v1109
        %v1114 = vmul.f32 %v911, %v1106
        %v1115 = vmul.f32 %v912, %v1107
        %v1116 = vmul.f32 %v913, %v1108
        %v1117 = vmul.f32 %v914, %v1109
        %v1118 = vmul.f32 %v915, %v1106
        %v1119 = vmul.f32 %v916, %v1107
        %v1120 = vmul.f32 %v917, %v1108
        %v1121 = vmul.f32 %v918, %v1109
        %v1122 = vmul.f32 %v919, %v1106
        %v1123 = vmul.f32 %v920, %v1107
        %v1124 = vmul.f32 %v921, %v1108
        %v1125 = vmul.f32 %v922, %v1109
        %v1126 = vmul.f32 %v923, %v1106
        %v1127 = vmul.f32 %v924, %v1107
        %v1128 = vmul.f32 %v925, %v1108
        %v1129 = vmul.f32 %v926, %v1109
        %v1130 = vmul.f32 %v927, %v1106
        %v1131 = vmul.f32 %v928, %v1107
        %v1132 = vmul.f32 %v929, %v1108
        %v1133 = vmul.f32 %v930, %v1109
        %v1134 = vmul.f32 %v931, %v1106
        %v1135 = vmul.f32 %v932, %v1107
        %v1136 = vmul.f32 %v933, %v1108
        %v1137 = vmul.f32 %v934, %v1109
        %v1138 = vmul.f32 %v935, %v1106
        %v1139 = vmul.f32 %v936, %v1107
        %v1140 = vmul.f32 %v937, %v1108
        %v1141 = vmul.f32 %v938, %v1109
        %v1142 = vadd.f32 %v1074, %v1110
        %v1143 = vadd.f32 %v1075, %v1111
        %v1144 = vadd.f32 %v1076, %v1112
        %v1145 = vadd.f32 %v1077, %v1113
        %v1146 = vadd.f32 %v1078, %v1114
        %v1147 = vadd.f32 %v1079, %v1115
        %v1148 = vadd.f32 %v1080, %v1116
        %v1149 = vadd.f32 %v1081, %v1117
        %v1150 = vadd.f32 %v1082, %v1118
        %v1151 = vadd.f32 %v1083, %v1119
        %v1152 = vadd.f32 %v1084, %v1120
        %v1153 = vadd.f32 %v1085, %v1121
        %v1154 = vadd.f32 %v1086, %v1122
        %v1155 = vadd.f32 %v1087, %v1123
        %v1156 = vadd.f32 %v1088, %v1124
        %v1157 = vadd.f32 %v1089, %v1125
        %v1158 = vadd.f32 %v1090, %v1126
        %v1159 = vadd.f32 %v1091, %v1127
        %v1160 = vadd.f32 %v1092, %v1128
        %v1161 = vadd.f32 %v1093, %v1129
        %v1162 = vadd.f32 %v1094, %v1130
        %v1163 = vadd.f32 %v1095, %v1131
        %v1164 = vadd.f32 %v1096, %v1132
        %v1165 = vadd.f32 %v1097, %v1133
        %v1166 = vadd.f32 %v1098, %v1134
        %v1167 = vadd.f32 %v1099, %v1135
        %v1168 = vadd.f32 %v1100, %v1136
        %v1169 = vadd.f32 %v1101, %v1137
        %v1170 = vadd.f32 %v1102, %v1138
        %v1171 = vadd.f32 %v1103, %v1139
        %v1172 = vadd.f32 %v1104, %v1140
        %v1173 = vadd.f32 %v1105, %v1141
        %1174 = vrot.lane.b32.xlu0 %v907, 96
        %v1175 = vpop.permute.xlu0 %1174
        %1176 = vrot.lane.b32.xlu0 %v911, 96
        %v1177 = vpop.permute.xlu0 %1176
        %1178 = vrot.lane.b32.xlu0 %v915, 96
        %v1179 = vpop.permute.xlu0 %1178
        %1180 = vrot.lane.b32.xlu0 %v919, 96
        %v1181 = vpop.permute.xlu0 %1180
        %1182 = vrot.lane.b32.xlu0 %v923, 96
        %v1183 = vpop.permute.xlu0 %1182
        %1184 = vrot.lane.b32.xlu0 %v927, 96
        %v1185 = vpop.permute.xlu0 %1184
        %1186 = vrot.lane.b32.xlu0 %v931, 96
        %v1187 = vpop.permute.xlu0 %1186
        %1188 = vrot.lane.b32.xlu0 %v935, 96
        %v1189 = vpop.permute.xlu0 %1188
        %1190 = vrot.lane.b32.xlu0 %v908, 96
        %v1191 = vpop.permute.xlu0 %1190
        %1192 = vrot.lane.b32.xlu0 %v912, 96
        %v1193 = vpop.permute.xlu0 %1192
        %1194 = vrot.lane.b32.xlu0 %v916, 96
        %v1195 = vpop.permute.xlu0 %1194
        %1196 = vrot.lane.b32.xlu0 %v920, 96
        %v1197 = vpop.permute.xlu0 %1196
        %1198 = vrot.lane.b32.xlu0 %v924, 96
        %v1199 = vpop.permute.xlu0 %1198
        %1200 = vrot.lane.b32.xlu0 %v928, 96
        %v1201 = vpop.permute.xlu0 %1200
        %1202 = vrot.lane.b32.xlu0 %v932, 96
        %v1203 = vpop.permute.xlu0 %1202
        %1204 = vrot.lane.b32.xlu0 %v936, 96
        %v1205 = vpop.permute.xlu0 %1204
        %1206 = vrot.lane.b32.xlu0 %v909, 96
        %v1207 = vpop.permute.xlu0 %1206
        %1208 = vrot.lane.b32.xlu0 %v913, 96
        %v1209 = vpop.permute.xlu0 %1208
        %1210 = vrot.lane.b32.xlu0 %v917, 96
        %v1211 = vpop.permute.xlu0 %1210
        %1212 = vrot.lane.b32.xlu0 %v921, 96
        %v1213 = vpop.permute.xlu0 %1212
        %1214 = vrot.lane.b32.xlu0 %v925, 96
        %v1215 = vpop.permute.xlu0 %1214
        %1216 = vrot.lane.b32.xlu0 %v929, 96
        %v1217 = vpop.permute.xlu0 %1216
        %1218 = vrot.lane.b32.xlu0 %v933, 96
        %v1219 = vpop.permute.xlu0 %1218
        %1220 = vrot.lane.b32.xlu0 %v937, 96
        %v1221 = vpop.permute.xlu0 %1220
        %1222 = vrot.lane.b32.xlu0 %v910, 96
        %v1223 = vpop.permute.xlu0 %1222
        %1224 = vrot.lane.b32.xlu0 %v914, 96
        %v1225 = vpop.permute.xlu0 %1224
        %1226 = vrot.lane.b32.xlu0 %v918, 96
        %v1227 = vpop.permute.xlu0 %1226
        %1228 = vrot.lane.b32.xlu0 %v922, 96
        %v1229 = vpop.permute.xlu0 %1228
        %1230 = vrot.lane.b32.xlu0 %v926, 96
        %v1231 = vpop.permute.xlu0 %1230
        %1232 = vrot.lane.b32.xlu0 %v930, 96
        %v1233 = vpop.permute.xlu0 %1232
        %1234 = vrot.lane.b32.xlu0 %v934, 96
        %v1235 = vpop.permute.xlu0 %1234
        %1236 = vrot.lane.b32.xlu0 %v938, 96
        %v1237 = vpop.permute.xlu0 %1236
        %vm1238 = vcmp.lt.s32.totalorder %v1004, 96
        %v1239 = vsel %vm1238, %v1207, %v1223
        %v1240 = vsel %vm1238, %v1209, %v1225
        %v1241 = vsel %vm1238, %v1211, %v1227
        %v1242 = vsel %vm1238, %v1213, %v1229
        %v1243 = vsel %vm1238, %v1215, %v1231
        %v1244 = vsel %vm1238, %v1217, %v1233
        %v1245 = vsel %vm1238, %v1219, %v1235
        %v1246 = vsel %vm1238, %v1221, %v1237
        %v1247 = vsel %vm1238, %v1191, %v1207
        %v1248 = vsel %vm1238, %v1193, %v1209
        %v1249 = vsel %vm1238, %v1195, %v1211
        %v1250 = vsel %vm1238, %v1197, %v1213
        %v1251 = vsel %vm1238, %v1199, %v1215
        %v1252 = vsel %vm1238, %v1201, %v1217
        %v1253 = vsel %vm1238, %v1203, %v1219
        %v1254 = vsel %vm1238, %v1205, %v1221
        %v1255 = vsel %vm1238, %v1175, %v1191
        %v1256 = vsel %vm1238, %v1177, %v1193
        %v1257 = vsel %vm1238, %v1179, %v1195
        %v1258 = vsel %vm1238, %v1181, %v1197
        %v1259 = vsel %vm1238, %v1183, %v1199
        %v1260 = vsel %vm1238, %v1185, %v1201
        %v1261 = vsel %vm1238, %v1187, %v1203
        %v1262 = vsel %vm1238, %v1189, %v1205
        %v1263 = vsel %vm1238, %v1223, %v1175
        %v1264 = vsel %vm1238, %v1225, %v1177
        %v1265 = vsel %vm1238, %v1227, %v1179
        %v1266 = vsel %vm1238, %v1229, %v1181
        %v1267 = vsel %vm1238, %v1231, %v1183
        %v1268 = vsel %vm1238, %v1233, %v1185
        %v1269 = vsel %vm1238, %v1235, %v1187
        %v1270 = vsel %vm1238, %v1237, %v1189
        %v1271 = vperm.slane %v705, 2
        %v1272 = vperm.slane %v706, 2
        %v1273 = vperm.slane %v707, 2
        %v1274 = vperm.slane %v708, 2
        %v1275 = vmul.f32 %v1255, %v1271
        %v1276 = vmul.f32 %v1247, %v1272
        %v1277 = vmul.f32 %v1239, %v1273
        %v1278 = vmul.f32 %v1263, %v1274
        %v1279 = vmul.f32 %v1256, %v1271
        %v1280 = vmul.f32 %v1248, %v1272
        %v1281 = vmul.f32 %v1240, %v1273
        %v1282 = vmul.f32 %v1264, %v1274
        %v1283 = vmul.f32 %v1257, %v1271
        %v1284 = vmul.f32 %v1249, %v1272
        %v1285 = vmul.f32 %v1241, %v1273
        %v1286 = vmul.f32 %v1265, %v1274
        %v1287 = vmul.f32 %v1258, %v1271
        %v1288 = vmul.f32 %v1250, %v1272
        %v1289 = vmul.f32 %v1242, %v1273
        %v1290 = vmul.f32 %v1266, %v1274
        %v1291 = vmul.f32 %v1259, %v1271
        %v1292 = vmul.f32 %v1251, %v1272
        %v1293 = vmul.f32 %v1243, %v1273
        %v1294 = vmul.f32 %v1267, %v1274
        %v1295 = vmul.f32 %v1260, %v1271
        %v1296 = vmul.f32 %v1252, %v1272
        %v1297 = vmul.f32 %v1244, %v1273
        %v1298 = vmul.f32 %v1268, %v1274
        %v1299 = vmul.f32 %v1261, %v1271
        %v1300 = vmul.f32 %v1253, %v1272
        %v1301 = vmul.f32 %v1245, %v1273
        %v1302 = vmul.f32 %v1269, %v1274
        %v1303 = vmul.f32 %v1262, %v1271
        %v1304 = vmul.f32 %v1254, %v1272
        %v1305 = vmul.f32 %v1246, %v1273
        %v1306 = vmul.f32 %v1270, %v1274
        %v1307 = vadd.f32 %v1142, %v1275
        %v1308 = vadd.f32 %v1143, %v1276
        %v1309 = vadd.f32 %v1144, %v1277
        %v1310 = vadd.f32 %v1145, %v1278
        %v1311 = vadd.f32 %v1146, %v1279
        %v1312 = vadd.f32 %v1147, %v1280
        %v1313 = vadd.f32 %v1148, %v1281
        %v1314 = vadd.f32 %v1149, %v1282
        %v1315 = vadd.f32 %v1150, %v1283
        %v1316 = vadd.f32 %v1151, %v1284
        %v1317 = vadd.f32 %v1152, %v1285
        %v1318 = vadd.f32 %v1153, %v1286
        %v1319 = vadd.f32 %v1154, %v1287
        %v1320 = vadd.f32 %v1155, %v1288
        %v1321 = vadd.f32 %v1156, %v1289
        %v1322 = vadd.f32 %v1157, %v1290
        %v1323 = vadd.f32 %v1158, %v1291
        %v1324 = vadd.f32 %v1159, %v1292
        %v1325 = vadd.f32 %v1160, %v1293
        %v1326 = vadd.f32 %v1161, %v1294
        %v1327 = vadd.f32 %v1162, %v1295
        %v1328 = vadd.f32 %v1163, %v1296
        %v1329 = vadd.f32 %v1164, %v1297
        %v1330 = vadd.f32 %v1165, %v1298
        %v1331 = vadd.f32 %v1166, %v1299
        %v1332 = vadd.f32 %v1167, %v1300
        %v1333 = vadd.f32 %v1168, %v1301
        %v1334 = vadd.f32 %v1169, %v1302
        %v1335 = vadd.f32 %v1170, %v1303
        %v1336 = vadd.f32 %v1171, %v1304
        %v1337 = vadd.f32 %v1172, %v1305
        %v1338 = vadd.f32 %v1173, %v1306
        %1339 = vrot.lane.b32.xlu0 %v673, 32
        %v1340 = vpop.permute.xlu0 %1339
        %1341 = vrot.lane.b32.xlu0 %v677, 32
        %v1342 = vpop.permute.xlu0 %1341
        %1343 = vrot.lane.b32.xlu0 %v681, 32
        %v1344 = vpop.permute.xlu0 %1343
        %1345 = vrot.lane.b32.xlu0 %v685, 32
        %v1346 = vpop.permute.xlu0 %1345
        %1347 = vrot.lane.b32.xlu0 %v689, 32
        %v1348 = vpop.permute.xlu0 %1347
        %1349 = vrot.lane.b32.xlu0 %v693, 32
        %v1350 = vpop.permute.xlu0 %1349
        %1351 = vrot.lane.b32.xlu0 %v697, 32
        %v1352 = vpop.permute.xlu0 %1351
        %1353 = vrot.lane.b32.xlu0 %v701, 32
        %v1354 = vpop.permute.xlu0 %1353
        %1355 = vrot.lane.b32.xlu0 %v674, 32
        %v1356 = vpop.permute.xlu0 %1355
        %1357 = vrot.lane.b32.xlu0 %v678, 32
        %v1358 = vpop.permute.xlu0 %1357
        %1359 = vrot.lane.b32.xlu0 %v682, 32
        %v1360 = vpop.permute.xlu0 %1359
        %1361 = vrot.lane.b32.xlu0 %v686, 32
        %v1362 = vpop.permute.xlu0 %1361
        %1363 = vrot.lane.b32.xlu0 %v690, 32
        %v1364 = vpop.permute.xlu0 %1363
        %1365 = vrot.lane.b32.xlu0 %v694, 32
        %v1366 = vpop.permute.xlu0 %1365
        %1367 = vrot.lane.b32.xlu0 %v698, 32
        %v1368 = vpop.permute.xlu0 %1367
        %1369 = vrot.lane.b32.xlu0 %v702, 32
        %v1370 = vpop.permute.xlu0 %1369
        %1371 = vrot.lane.b32.xlu0 %v675, 32
        %v1372 = vpop.permute.xlu0 %1371
        %1373 = vrot.lane.b32.xlu0 %v679, 32
        %v1374 = vpop.permute.xlu0 %1373
        %1375 = vrot.lane.b32.xlu0 %v683, 32
        %v1376 = vpop.permute.xlu0 %1375
        %1377 = vrot.lane.b32.xlu0 %v687, 32
        %v1378 = vpop.permute.xlu0 %1377
        %1379 = vrot.lane.b32.xlu0 %v691, 32
        %v1380 = vpop.permute.xlu0 %1379
        %1381 = vrot.lane.b32.xlu0 %v695, 32
        %v1382 = vpop.permute.xlu0 %1381
        %1383 = vrot.lane.b32.xlu0 %v699, 32
        %v1384 = vpop.permute.xlu0 %1383
        %1385 = vrot.lane.b32.xlu0 %v703, 32
        %v1386 = vpop.permute.xlu0 %1385
        %1387 = vrot.lane.b32.xlu0 %v676, 32
        %v1388 = vpop.permute.xlu0 %1387
        %1389 = vrot.lane.b32.xlu0 %v680, 32
        %v1390 = vpop.permute.xlu0 %1389
        %1391 = vrot.lane.b32.xlu0 %v684, 32
        %v1392 = vpop.permute.xlu0 %1391
        %1393 = vrot.lane.b32.xlu0 %v688, 32
        %v1394 = vpop.permute.xlu0 %1393
        %1395 = vrot.lane.b32.xlu0 %v692, 32
        %v1396 = vpop.permute.xlu0 %1395
        %1397 = vrot.lane.b32.xlu0 %v696, 32
        %v1398 = vpop.permute.xlu0 %1397
        %1399 = vrot.lane.b32.xlu0 %v700, 32
        %v1400 = vpop.permute.xlu0 %1399
        %1401 = vrot.lane.b32.xlu0 %v704, 32
        %v1402 = vpop.permute.xlu0 %1401
        %v1403 = vsel %vm1005, %v1372, %v1388
        %v1404 = vsel %vm1005, %v1374, %v1390
        %v1405 = vsel %vm1005, %v1376, %v1392
        %v1406 = vsel %vm1005, %v1378, %v1394
        %v1407 = vsel %vm1005, %v1380, %v1396
        %v1408 = vsel %vm1005, %v1382, %v1398
        %v1409 = vsel %vm1005, %v1384, %v1400
        %v1410 = vsel %vm1005, %v1386, %v1402
        %v1411 = vsel %vm1005, %v1356, %v1372
        %v1412 = vsel %vm1005, %v1358, %v1374
        %v1413 = vsel %vm1005, %v1360, %v1376
        %v1414 = vsel %vm1005, %v1362, %v1378
        %v1415 = vsel %vm1005, %v1364, %v1380
        %v1416 = vsel %vm1005, %v1366, %v1382
        %v1417 = vsel %vm1005, %v1368, %v1384
        %v1418 = vsel %vm1005, %v1370, %v1386
        %v1419 = vsel %vm1005, %v1340, %v1356
        %v1420 = vsel %vm1005, %v1342, %v1358
        %v1421 = vsel %vm1005, %v1344, %v1360
        %v1422 = vsel %vm1005, %v1346, %v1362
        %v1423 = vsel %vm1005, %v1348, %v1364
        %v1424 = vsel %vm1005, %v1350, %v1366
        %v1425 = vsel %vm1005, %v1352, %v1368
        %v1426 = vsel %vm1005, %v1354, %v1370
        %v1427 = vsel %vm1005, %v1388, %v1340
        %v1428 = vsel %vm1005, %v1390, %v1342
        %v1429 = vsel %vm1005, %v1392, %v1344
        %v1430 = vsel %vm1005, %v1394, %v1346
        %v1431 = vsel %vm1005, %v1396, %v1348
        %v1432 = vsel %vm1005, %v1398, %v1350
        %v1433 = vsel %vm1005, %v1400, %v1352
        %v1434 = vsel %vm1005, %v1402, %v1354
        %v1435 = vperm.slane %v705, 3
        %v1436 = vperm.slane %v706, 3
        %v1437 = vperm.slane %v707, 3
        %v1438 = vperm.slane %v708, 3
        %v1439 = vmul.f32 %v1427, %v1435
        %v1440 = vmul.f32 %v1419, %v1436
        %v1441 = vmul.f32 %v1411, %v1437
        %v1442 = vmul.f32 %v1403, %v1438
        %v1443 = vmul.f32 %v1428, %v1435
        %v1444 = vmul.f32 %v1420, %v1436
        %v1445 = vmul.f32 %v1412, %v1437
        %v1446 = vmul.f32 %v1404, %v1438
        %v1447 = vmul.f32 %v1429, %v1435
        %v1448 = vmul.f32 %v1421, %v1436
        %v1449 = vmul.f32 %v1413, %v1437
        %v1450 = vmul.f32 %v1405, %v1438
        %v1451 = vmul.f32 %v1430, %v1435
        %v1452 = vmul.f32 %v1422, %v1436
        %v1453 = vmul.f32 %v1414, %v1437
        %v1454 = vmul.f32 %v1406, %v1438
        %v1455 = vmul.f32 %v1431, %v1435
        %v1456 = vmul.f32 %v1423, %v1436
        %v1457 = vmul.f32 %v1415, %v1437
        %v1458 = vmul.f32 %v1407, %v1438
        %v1459 = vmul.f32 %v1432, %v1435
        %v1460 = vmul.f32 %v1424, %v1436
        %v1461 = vmul.f32 %v1416, %v1437
        %v1462 = vmul.f32 %v1408, %v1438
        %v1463 = vmul.f32 %v1433, %v1435
        %v1464 = vmul.f32 %v1425, %v1436
        %v1465 = vmul.f32 %v1417, %v1437
        %v1466 = vmul.f32 %v1409, %v1438
        %v1467 = vmul.f32 %v1434, %v1435
        %v1468 = vmul.f32 %v1426, %v1436
        %v1469 = vmul.f32 %v1418, %v1437
        %v1470 = vmul.f32 %v1410, %v1438
        %v1471 = vadd.f32 %v1307, %v1439
        %v1472 = vadd.f32 %v1308, %v1440
        %v1473 = vadd.f32 %v1309, %v1441
        %v1474 = vadd.f32 %v1310, %v1442
        %v1475 = vadd.f32 %v1311, %v1443
        %v1476 = vadd.f32 %v1312, %v1444
        %v1477 = vadd.f32 %v1313, %v1445
        %v1478 = vadd.f32 %v1314, %v1446
        %v1479 = vadd.f32 %v1315, %v1447
        %v1480 = vadd.f32 %v1316, %v1448
        %v1481 = vadd.f32 %v1317, %v1449
        %v1482 = vadd.f32 %v1318, %v1450
        %v1483 = vadd.f32 %v1319, %v1451
        %v1484 = vadd.f32 %v1320, %v1452
        %v1485 = vadd.f32 %v1321, %v1453
        %v1486 = vadd.f32 %v1322, %v1454
        %v1487 = vadd.f32 %v1323, %v1455
        %v1488 = vadd.f32 %v1324, %v1456
        %v1489 = vadd.f32 %v1325, %v1457
        %v1490 = vadd.f32 %v1326, %v1458
        %v1491 = vadd.f32 %v1327, %v1459
        %v1492 = vadd.f32 %v1328, %v1460
        %v1493 = vadd.f32 %v1329, %v1461
        %v1494 = vadd.f32 %v1330, %v1462
        %v1495 = vadd.f32 %v1331, %v1463
        %v1496 = vadd.f32 %v1332, %v1464
        %v1497 = vadd.f32 %v1333, %v1465
        %v1498 = vadd.f32 %v1334, %v1466
        %v1499 = vadd.f32 %v1335, %v1467
        %v1500 = vadd.f32 %v1336, %v1468
        %v1501 = vadd.f32 %v1337, %v1469
        %v1502 = vadd.f32 %v1338, %v1470
        %v1503 = vperm.slane %v705, 4
        %v1504 = vperm.slane %v706, 4
        %v1505 = vperm.slane %v707, 4
        %v1506 = vperm.slane %v708, 4
        %v1507 = vmul.f32 %v673, %v1503
        %v1508 = vmul.f32 %v674, %v1504
        %v1509 = vmul.f32 %v675, %v1505
        %v1510 = vmul.f32 %v676, %v1506
        %v1511 = vmul.f32 %v677, %v1503
        %v1512 = vmul.f32 %v678, %v1504
        %v1513 = vmul.f32 %v679, %v1505
        %v1514 = vmul.f32 %v680, %v1506
        %v1515 = vmul.f32 %v681, %v1503
        %v1516 = vmul.f32 %v682, %v1504
        %v1517 = vmul.f32 %v683, %v1505
        %v1518 = vmul.f32 %v684, %v1506
        %v1519 = vmul.f32 %v685, %v1503
        %v1520 = vmul.f32 %v686, %v1504
        %v1521 = vmul.f32 %v687, %v1505
        %v1522 = vmul.f32 %v688, %v1506
        %v1523 = vmul.f32 %v689, %v1503
        %v1524 = vmul.f32 %v690, %v1504
        %v1525 = vmul.f32 %v691, %v1505
        %v1526 = vmul.f32 %v692, %v1506
        %v1527 = vmul.f32 %v693, %v1503
        %v1528 = vmul.f32 %v694, %v1504
        %v1529 = vmul.f32 %v695, %v1505
        %v1530 = vmul.f32 %v696, %v1506
        %v1531 = vmul.f32 %v697, %v1503
        %v1532 = vmul.f32 %v698, %v1504
        %v1533 = vmul.f32 %v699, %v1505
        %v1534 = vmul.f32 %v700, %v1506
        %v1535 = vmul.f32 %v701, %v1503
        %v1536 = vmul.f32 %v702, %v1504
        %v1537 = vmul.f32 %v703, %v1505
        %v1538 = vmul.f32 %v704, %v1506
        %v1539 = vadd.f32 %v1471, %v1507
        %v1540 = vadd.f32 %v1472, %v1508
        %v1541 = vadd.f32 %v1473, %v1509
        %v1542 = vadd.f32 %v1474, %v1510
        %v1543 = vadd.f32 %v1475, %v1511
        %v1544 = vadd.f32 %v1476, %v1512
        %v1545 = vadd.f32 %v1477, %v1513
        %v1546 = vadd.f32 %v1478, %v1514
        %v1547 = vadd.f32 %v1479, %v1515
        %v1548 = vadd.f32 %v1480, %v1516
        %v1549 = vadd.f32 %v1481, %v1517
        %v1550 = vadd.f32 %v1482, %v1518
        %v1551 = vadd.f32 %v1483, %v1519
        %v1552 = vadd.f32 %v1484, %v1520
        %v1553 = vadd.f32 %v1485, %v1521
        %v1554 = vadd.f32 %v1486, %v1522
        %v1555 = vadd.f32 %v1487, %v1523
        %v1556 = vadd.f32 %v1488, %v1524
        %v1557 = vadd.f32 %v1489, %v1525
        %v1558 = vadd.f32 %v1490, %v1526
        %v1559 = vadd.f32 %v1491, %v1527
        %v1560 = vadd.f32 %v1492, %v1528
        %v1561 = vadd.f32 %v1493, %v1529
        %v1562 = vadd.f32 %v1494, %v1530
        %v1563 = vadd.f32 %v1495, %v1531
        %v1564 = vadd.f32 %v1496, %v1532
        %v1565 = vadd.f32 %v1497, %v1533
        %v1566 = vadd.f32 %v1498, %v1534
        %v1567 = vadd.f32 %v1499, %v1535
        %v1568 = vadd.f32 %v1500, %v1536
        %v1569 = vadd.f32 %v1501, %v1537
        %v1570 = vadd.f32 %v1502, %v1538
        %1571 = vrot.lane.b32.xlu0 %v673, 96
        %v1572 = vpop.permute.xlu0 %1571
        %1573 = vrot.lane.b32.xlu0 %v677, 96
        %v1574 = vpop.permute.xlu0 %1573
        %1575 = vrot.lane.b32.xlu0 %v681, 96
        %v1576 = vpop.permute.xlu0 %1575
        %1577 = vrot.lane.b32.xlu0 %v685, 96
        %v1578 = vpop.permute.xlu0 %1577
        %1579 = vrot.lane.b32.xlu0 %v689, 96
        %v1580 = vpop.permute.xlu0 %1579
        %1581 = vrot.lane.b32.xlu0 %v693, 96
        %v1582 = vpop.permute.xlu0 %1581
        %1583 = vrot.lane.b32.xlu0 %v697, 96
        %v1584 = vpop.permute.xlu0 %1583
        %1585 = vrot.lane.b32.xlu0 %v701, 96
        %v1586 = vpop.permute.xlu0 %1585
        %1587 = vrot.lane.b32.xlu0 %v674, 96
        %v1588 = vpop.permute.xlu0 %1587
        %1589 = vrot.lane.b32.xlu0 %v678, 96
        %v1590 = vpop.permute.xlu0 %1589
        %1591 = vrot.lane.b32.xlu0 %v682, 96
        %v1592 = vpop.permute.xlu0 %1591
        %1593 = vrot.lane.b32.xlu0 %v686, 96
        %v1594 = vpop.permute.xlu0 %1593
        %1595 = vrot.lane.b32.xlu0 %v690, 96
        %v1596 = vpop.permute.xlu0 %1595
        %1597 = vrot.lane.b32.xlu0 %v694, 96
        %v1598 = vpop.permute.xlu0 %1597
        %1599 = vrot.lane.b32.xlu0 %v698, 96
        %v1600 = vpop.permute.xlu0 %1599
        %1601 = vrot.lane.b32.xlu0 %v702, 96
        %v1602 = vpop.permute.xlu0 %1601
        %1603 = vrot.lane.b32.xlu0 %v675, 96
        %v1604 = vpop.permute.xlu0 %1603
        %1605 = vrot.lane.b32.xlu0 %v679, 96
        %v1606 = vpop.permute.xlu0 %1605
        %1607 = vrot.lane.b32.xlu0 %v683, 96
        %v1608 = vpop.permute.xlu0 %1607
        %1609 = vrot.lane.b32.xlu0 %v687, 96
        %v1610 = vpop.permute.xlu0 %1609
        %1611 = vrot.lane.b32.xlu0 %v691, 96
        %v1612 = vpop.permute.xlu0 %1611
        %1613 = vrot.lane.b32.xlu0 %v695, 96
        %v1614 = vpop.permute.xlu0 %1613
        %1615 = vrot.lane.b32.xlu0 %v699, 96
        %v1616 = vpop.permute.xlu0 %1615
        %1617 = vrot.lane.b32.xlu0 %v703, 96
        %v1618 = vpop.permute.xlu0 %1617
        %1619 = vrot.lane.b32.xlu0 %v676, 96
        %v1620 = vpop.permute.xlu0 %1619
        %1621 = vrot.lane.b32.xlu0 %v680, 96
        %v1622 = vpop.permute.xlu0 %1621
        %1623 = vrot.lane.b32.xlu0 %v684, 96
        %v1624 = vpop.permute.xlu0 %1623
        %1625 = vrot.lane.b32.xlu0 %v688, 96
        %v1626 = vpop.permute.xlu0 %1625
        %1627 = vrot.lane.b32.xlu0 %v692, 96
        %v1628 = vpop.permute.xlu0 %1627
        %1629 = vrot.lane.b32.xlu0 %v696, 96
        %v1630 = vpop.permute.xlu0 %1629
        %1631 = vrot.lane.b32.xlu0 %v700, 96
        %v1632 = vpop.permute.xlu0 %1631
        %1633 = vrot.lane.b32.xlu0 %v704, 96
        %v1634 = vpop.permute.xlu0 %1633
        %v1635 = vsel %vm1238, %v1604, %v1620
        %v1636 = vsel %vm1238, %v1606, %v1622
        %v1637 = vsel %vm1238, %v1608, %v1624
        %v1638 = vsel %vm1238, %v1610, %v1626
        %v1639 = vsel %vm1238, %v1612, %v1628
        %v1640 = vsel %vm1238, %v1614, %v1630
        %v1641 = vsel %vm1238, %v1616, %v1632
        %v1642 = vsel %vm1238, %v1618, %v1634
        %v1643 = vsel %vm1238, %v1588, %v1604
        %v1644 = vsel %vm1238, %v1590, %v1606
        %v1645 = vsel %vm1238, %v1592, %v1608
        %v1646 = vsel %vm1238, %v1594, %v1610
        %v1647 = vsel %vm1238, %v1596, %v1612
        %v1648 = vsel %vm1238, %v1598, %v1614
        %v1649 = vsel %vm1238, %v1600, %v1616
        %v1650 = vsel %vm1238, %v1602, %v1618
        %v1651 = vsel %vm1238, %v1572, %v1588
        %v1652 = vsel %vm1238, %v1574, %v1590
        %v1653 = vsel %vm1238, %v1576, %v1592
        %v1654 = vsel %vm1238, %v1578, %v1594
        %v1655 = vsel %vm1238, %v1580, %v1596
        %v1656 = vsel %vm1238, %v1582, %v1598
        %v1657 = vsel %vm1238, %v1584, %v1600
        %v1658 = vsel %vm1238, %v1586, %v1602
        %v1659 = vsel %vm1238, %v1620, %v1572
        %v1660 = vsel %vm1238, %v1622, %v1574
        %v1661 = vsel %vm1238, %v1624, %v1576
        %v1662 = vsel %vm1238, %v1626, %v1578
        %v1663 = vsel %vm1238, %v1628, %v1580
        %v1664 = vsel %vm1238, %v1630, %v1582
        %v1665 = vsel %vm1238, %v1632, %v1584
        %v1666 = vsel %vm1238, %v1634, %v1586
        %v1667 = vperm.slane %v705, 5
        %v1668 = vperm.slane %v706, 5
        %v1669 = vperm.slane %v707, 5
        %v1670 = vperm.slane %v708, 5
        %v1671 = vmul.f32 %v1651, %v1667
        %v1672 = vmul.f32 %v1643, %v1668
        %v1673 = vmul.f32 %v1635, %v1669
        %v1674 = vmul.f32 %v1659, %v1670
        %v1675 = vmul.f32 %v1652, %v1667
        %v1676 = vmul.f32 %v1644, %v1668
        %v1677 = vmul.f32 %v1636, %v1669
        %v1678 = vmul.f32 %v1660, %v1670
        %v1679 = vmul.f32 %v1653, %v1667
        %v1680 = vmul.f32 %v1645, %v1668
        %v1681 = vmul.f32 %v1637, %v1669
        %v1682 = vmul.f32 %v1661, %v1670
        %v1683 = vmul.f32 %v1654, %v1667
        %v1684 = vmul.f32 %v1646, %v1668
        %v1685 = vmul.f32 %v1638, %v1669
        %v1686 = vmul.f32 %v1662, %v1670
        %v1687 = vmul.f32 %v1655, %v1667
        %v1688 = vmul.f32 %v1647, %v1668
        %v1689 = vmul.f32 %v1639, %v1669
        %v1690 = vmul.f32 %v1663, %v1670
        %v1691 = vmul.f32 %v1656, %v1667
        %v1692 = vmul.f32 %v1648, %v1668
        %v1693 = vmul.f32 %v1640, %v1669
        %v1694 = vmul.f32 %v1664, %v1670
        %v1695 = vmul.f32 %v1657, %v1667
        %v1696 = vmul.f32 %v1649, %v1668
        %v1697 = vmul.f32 %v1641, %v1669
        %v1698 = vmul.f32 %v1665, %v1670
        %v1699 = vmul.f32 %v1658, %v1667
        %v1700 = vmul.f32 %v1650, %v1668
        %v1701 = vmul.f32 %v1642, %v1669
        %v1702 = vmul.f32 %v1666, %v1670
        %v1703 = vadd.f32 %v1539, %v1671
        %v1704 = vadd.f32 %v1540, %v1672
        %v1705 = vadd.f32 %v1541, %v1673
        %v1706 = vadd.f32 %v1542, %v1674
        %v1707 = vadd.f32 %v1543, %v1675
        %v1708 = vadd.f32 %v1544, %v1676
        %v1709 = vadd.f32 %v1545, %v1677
        %v1710 = vadd.f32 %v1546, %v1678
        %v1711 = vadd.f32 %v1547, %v1679
        %v1712 = vadd.f32 %v1548, %v1680
        %v1713 = vadd.f32 %v1549, %v1681
        %v1714 = vadd.f32 %v1550, %v1682
        %v1715 = vadd.f32 %v1551, %v1683
        %v1716 = vadd.f32 %v1552, %v1684
        %v1717 = vadd.f32 %v1553, %v1685
        %v1718 = vadd.f32 %v1554, %v1686
        %v1719 = vadd.f32 %v1555, %v1687
        %v1720 = vadd.f32 %v1556, %v1688
        %v1721 = vadd.f32 %v1557, %v1689
        %v1722 = vadd.f32 %v1558, %v1690
        %v1723 = vadd.f32 %v1559, %v1691
        %v1724 = vadd.f32 %v1560, %v1692
        %v1725 = vadd.f32 %v1561, %v1693
        %v1726 = vadd.f32 %v1562, %v1694
        %v1727 = vadd.f32 %v1563, %v1695
        %v1728 = vadd.f32 %v1564, %v1696
        %v1729 = vadd.f32 %v1565, %v1697
        %v1730 = vadd.f32 %v1566, %v1698
        %v1731 = vadd.f32 %v1567, %v1699
        %v1732 = vadd.f32 %v1568, %v1700
        %v1733 = vadd.f32 %v1569, %v1701
        %v1734 = vadd.f32 %v1570, %v1702
        %vm1735 = vcmp.lt.s32.totalorder %v810, 15
        %vm1736 = vcmp.lt.s32.totalorder %v811, 15
        %vm1737 = vcmp.lt.s32.totalorder %v812, 15
        %vm1738 = vcmp.lt.s32.totalorder %v813, 15
        %vm1739 = vcmp.lt.s32.totalorder %v814, 15
        %vm1740 = vcmp.lt.s32.totalorder %v815, 15
        %vm1741 = vcmp.lt.s32.totalorder %v816, 15
        %vm1742 = vcmp.lt.s32.totalorder %v817, 15
        %v1743 = vrot.slane %v673, 1
        %v1744 = vrot.slane %v674, 1
        %v1745 = vrot.slane %v675, 1
        %v1746 = vrot.slane %v676, 1
        %v1747 = vrot.slane %v677, 1
        %v1748 = vrot.slane %v678, 1
        %v1749 = vrot.slane %v679, 1
        %v1750 = vrot.slane %v680, 1
        %v1751 = vrot.slane %v681, 1
        %v1752 = vrot.slane %v682, 1
        %v1753 = vrot.slane %v683, 1
        %v1754 = vrot.slane %v684, 1
        %v1755 = vrot.slane %v685, 1
        %v1756 = vrot.slane %v686, 1
        %v1757 = vrot.slane %v687, 1
        %v1758 = vrot.slane %v688, 1
        %v1759 = vrot.slane %v689, 1
        %v1760 = vrot.slane %v690, 1
        %v1761 = vrot.slane %v691, 1
        %v1762 = vrot.slane %v692, 1
        %v1763 = vrot.slane %v693, 1
        %v1764 = vrot.slane %v694, 1
        %v1765 = vrot.slane %v695, 1
        %v1766 = vrot.slane %v696, 1
        %v1767 = vrot.slane %v697, 1
        %v1768 = vrot.slane %v698, 1
        %v1769 = vrot.slane %v699, 1
        %v1770 = vrot.slane %v700, 1
        %v1771 = vrot.slane %v701, 1
        %v1772 = vrot.slane %v702, 1
        %v1773 = vrot.slane %v703, 1
        %v1774 = vrot.slane %v704, 1
        %vm1775 = vcmp.lt.s32.totalorder %v714, 7
        %v1776 = vsel %vm1775, %v1767, %v1771
        %v1777 = vsel %vm1775, %v1768, %v1772
        %v1778 = vsel %vm1775, %v1769, %v1773
        %v1779 = vsel %vm1775, %v1770, %v1774
        %v1780 = vsel %vm1775, %v1763, %v1767
        %v1781 = vsel %vm1775, %v1764, %v1768
        %v1782 = vsel %vm1775, %v1765, %v1769
        %v1783 = vsel %vm1775, %v1766, %v1770
        %v1784 = vsel %vm1775, %v1759, %v1763
        %v1785 = vsel %vm1775, %v1760, %v1764
        %v1786 = vsel %vm1775, %v1761, %v1765
        %v1787 = vsel %vm1775, %v1762, %v1766
        %v1788 = vsel %vm1775, %v1755, %v1759
        %v1789 = vsel %vm1775, %v1756, %v1760
        %v1790 = vsel %vm1775, %v1757, %v1761
        %v1791 = vsel %vm1775, %v1758, %v1762
        %v1792 = vsel %vm1775, %v1751, %v1755
        %v1793 = vsel %vm1775, %v1752, %v1756
        %v1794 = vsel %vm1775, %v1753, %v1757
        %v1795 = vsel %vm1775, %v1754, %v1758
        %v1796 = vsel %vm1775, %v1747, %v1751
        %v1797 = vsel %vm1775, %v1748, %v1752
        %v1798 = vsel %vm1775, %v1749, %v1753
        %v1799 = vsel %vm1775, %v1750, %v1754
        %v1800 = vsel %vm1775, %v1743, %v1747
        %v1801 = vsel %vm1775, %v1744, %v1748
        %v1802 = vsel %vm1775, %v1745, %v1749
        %v1803 = vsel %vm1775, %v1746, %v1750
        %v1804 = vsel %vm1775, %v1771, %v1743
        %v1805 = vsel %vm1775, %v1772, %v1744
        %v1806 = vsel %vm1775, %v1773, %v1745
        %v1807 = vsel %vm1775, %v1774, %v1746
        %v1808 = vsel %vm1735, 1, 0
        %v1809 = vsel %vm1736, 1, 0
        %v1810 = vsel %vm1737, 1, 0
        %v1811 = vsel %vm1738, 1, 0
        %v1812 = vsel %vm1739, 1, 0
        %v1813 = vsel %vm1740, 1, 0
        %v1814 = vsel %vm1741, 1, 0
        %v1815 = vsel %vm1742, 1, 0
        %vm1816 = vcmp.eq.s32.totalorder %v1808, 1
        %vm1817 = vcmp.eq.s32.totalorder %v1809, 1
        %vm1818 = vcmp.eq.s32.totalorder %v1810, 1
        %vm1819 = vcmp.eq.s32.totalorder %v1811, 1
        %vm1820 = vcmp.eq.s32.totalorder %v1812, 1
        %vm1821 = vcmp.eq.s32.totalorder %v1813, 1
        %vm1822 = vcmp.eq.s32.totalorder %v1814, 1
        %vm1823 = vcmp.eq.s32.totalorder %v1815, 1
        %v1824 = vsel %vm1816, %v1800, 0.0
        %v1825 = vsel %vm1816, %v1801, 0.0
        %v1826 = vsel %vm1816, %v1802, 0.0
        %v1827 = vsel %vm1816, %v1803, 0.0
        %v1828 = vsel %vm1817, %v1796, 0.0
        %v1829 = vsel %vm1817, %v1797, 0.0
        %v1830 = vsel %vm1817, %v1798, 0.0
        %v1831 = vsel %vm1817, %v1799, 0.0
        %v1832 = vsel %vm1818, %v1792, 0.0
        %v1833 = vsel %vm1818, %v1793, 0.0
        %v1834 = vsel %vm1818, %v1794, 0.0
        %v1835 = vsel %vm1818, %v1795, 0.0
        %v1836 = vsel %vm1819, %v1788, 0.0
        %v1837 = vsel %vm1819, %v1789, 0.0
        %v1838 = vsel %vm1819, %v1790, 0.0
        %v1839 = vsel %vm1819, %v1791, 0.0
        %v1840 = vsel %vm1820, %v1784, 0.0
        %v1841 = vsel %vm1820, %v1785, 0.0
        %v1842 = vsel %vm1820, %v1786, 0.0
        %v1843 = vsel %vm1820, %v1787, 0.0
        %v1844 = vsel %vm1821, %v1780, 0.0
        %v1845 = vsel %vm1821, %v1781, 0.0
        %v1846 = vsel %vm1821, %v1782, 0.0
        %v1847 = vsel %vm1821, %v1783, 0.0
        %v1848 = vsel %vm1822, %v1776, 0.0
        %v1849 = vsel %vm1822, %v1777, 0.0
        %v1850 = vsel %vm1822, %v1778, 0.0
        %v1851 = vsel %vm1822, %v1779, 0.0
        %v1852 = vsel %vm1823, %v1804, 0.0
        %v1853 = vsel %vm1823, %v1805, 0.0
        %v1854 = vsel %vm1823, %v1806, 0.0
        %v1855 = vsel %vm1823, %v1807, 0.0
        %1856 = vrot.lane.b32.xlu0 %v1824, 32
        %v1857 = vpop.permute.xlu0 %1856
        %1858 = vrot.lane.b32.xlu0 %v1828, 32
        %v1859 = vpop.permute.xlu0 %1858
        %1860 = vrot.lane.b32.xlu0 %v1832, 32
        %v1861 = vpop.permute.xlu0 %1860
        %1862 = vrot.lane.b32.xlu0 %v1836, 32
        %v1863 = vpop.permute.xlu0 %1862
        %1864 = vrot.lane.b32.xlu0 %v1840, 32
        %v1865 = vpop.permute.xlu0 %1864
        %1866 = vrot.lane.b32.xlu0 %v1844, 32
        %v1867 = vpop.permute.xlu0 %1866
        %1868 = vrot.lane.b32.xlu0 %v1848, 32
        %v1869 = vpop.permute.xlu0 %1868
        %1870 = vrot.lane.b32.xlu0 %v1852, 32
        %v1871 = vpop.permute.xlu0 %1870
        %1872 = vrot.lane.b32.xlu0 %v1825, 32
        %v1873 = vpop.permute.xlu0 %1872
        %1874 = vrot.lane.b32.xlu0 %v1829, 32
        %v1875 = vpop.permute.xlu0 %1874
        %1876 = vrot.lane.b32.xlu0 %v1833, 32
        %v1877 = vpop.permute.xlu0 %1876
        %1878 = vrot.lane.b32.xlu0 %v1837, 32
        %v1879 = vpop.permute.xlu0 %1878
        %1880 = vrot.lane.b32.xlu0 %v1841, 32
        %v1881 = vpop.permute.xlu0 %1880
        %1882 = vrot.lane.b32.xlu0 %v1845, 32
        %v1883 = vpop.permute.xlu0 %1882
        %1884 = vrot.lane.b32.xlu0 %v1849, 32
        %v1885 = vpop.permute.xlu0 %1884
        %1886 = vrot.lane.b32.xlu0 %v1853, 32
        %v1887 = vpop.permute.xlu0 %1886
        %1888 = vrot.lane.b32.xlu0 %v1826, 32
        %v1889 = vpop.permute.xlu0 %1888
        %1890 = vrot.lane.b32.xlu0 %v1830, 32
        %v1891 = vpop.permute.xlu0 %1890
        %1892 = vrot.lane.b32.xlu0 %v1834, 32
        %v1893 = vpop.permute.xlu0 %1892
        %1894 = vrot.lane.b32.xlu0 %v1838, 32
        %v1895 = vpop.permute.xlu0 %1894
        %1896 = vrot.lane.b32.xlu0 %v1842, 32
        %v1897 = vpop.permute.xlu0 %1896
        %1898 = vrot.lane.b32.xlu0 %v1846, 32
        %v1899 = vpop.permute.xlu0 %1898
        %1900 = vrot.lane.b32.xlu0 %v1850, 32
        %v1901 = vpop.permute.xlu0 %1900
        %1902 = vrot.lane.b32.xlu0 %v1854, 32
        %v1903 = vpop.permute.xlu0 %1902
        %1904 = vrot.lane.b32.xlu0 %v1827, 32
        %v1905 = vpop.permute.xlu0 %1904
        %1906 = vrot.lane.b32.xlu0 %v1831, 32
        %v1907 = vpop.permute.xlu0 %1906
        %1908 = vrot.lane.b32.xlu0 %v1835, 32
        %v1909 = vpop.permute.xlu0 %1908
        %1910 = vrot.lane.b32.xlu0 %v1839, 32
        %v1911 = vpop.permute.xlu0 %1910
        %1912 = vrot.lane.b32.xlu0 %v1843, 32
        %v1913 = vpop.permute.xlu0 %1912
        %1914 = vrot.lane.b32.xlu0 %v1847, 32
        %v1915 = vpop.permute.xlu0 %1914
        %1916 = vrot.lane.b32.xlu0 %v1851, 32
        %v1917 = vpop.permute.xlu0 %1916
        %1918 = vrot.lane.b32.xlu0 %v1855, 32
        %v1919 = vpop.permute.xlu0 %1918
        %v1920 = vsel %vm1005, %v1889, %v1905
        %v1921 = vsel %vm1005, %v1891, %v1907
        %v1922 = vsel %vm1005, %v1893, %v1909
        %v1923 = vsel %vm1005, %v1895, %v1911
        %v1924 = vsel %vm1005, %v1897, %v1913
        %v1925 = vsel %vm1005, %v1899, %v1915
        %v1926 = vsel %vm1005, %v1901, %v1917
        %v1927 = vsel %vm1005, %v1903, %v1919
        %v1928 = vsel %vm1005, %v1873, %v1889
        %v1929 = vsel %vm1005, %v1875, %v1891
        %v1930 = vsel %vm1005, %v1877, %v1893
        %v1931 = vsel %vm1005, %v1879, %v1895
        %v1932 = vsel %vm1005, %v1881, %v1897
        %v1933 = vsel %vm1005, %v1883, %v1899
        %v1934 = vsel %vm1005, %v1885, %v1901
        %v1935 = vsel %vm1005, %v1887, %v1903
        %v1936 = vsel %vm1005, %v1857, %v1873
        %v1937 = vsel %vm1005, %v1859, %v1875
        %v1938 = vsel %vm1005, %v1861, %v1877
        %v1939 = vsel %vm1005, %v1863, %v1879
        %v1940 = vsel %vm1005, %v1865, %v1881
        %v1941 = vsel %vm1005, %v1867, %v1883
        %v1942 = vsel %vm1005, %v1869, %v1885
        %v1943 = vsel %vm1005, %v1871, %v1887
        %v1944 = vsel %vm1005, %v1905, %v1857
        %v1945 = vsel %vm1005, %v1907, %v1859
        %v1946 = vsel %vm1005, %v1909, %v1861
        %v1947 = vsel %vm1005, %v1911, %v1863
        %v1948 = vsel %vm1005, %v1913, %v1865
        %v1949 = vsel %vm1005, %v1915, %v1867
        %v1950 = vsel %vm1005, %v1917, %v1869
        %v1951 = vsel %vm1005, %v1919, %v1871
        %v1952 = vperm.slane %v705, 6
        %v1953 = vperm.slane %v706, 6
        %v1954 = vperm.slane %v707, 6
        %v1955 = vperm.slane %v708, 6
        %v1956 = vmul.f32 %v1944, %v1952
        %v1957 = vmul.f32 %v1936, %v1953
        %v1958 = vmul.f32 %v1928, %v1954
        %v1959 = vmul.f32 %v1920, %v1955
        %v1960 = vmul.f32 %v1945, %v1952
        %v1961 = vmul.f32 %v1937, %v1953
        %v1962 = vmul.f32 %v1929, %v1954
        %v1963 = vmul.f32 %v1921, %v1955
        %v1964 = vmul.f32 %v1946, %v1952
        %v1965 = vmul.f32 %v1938, %v1953
        %v1966 = vmul.f32 %v1930, %v1954
        %v1967 = vmul.f32 %v1922, %v1955
        %v1968 = vmul.f32 %v1947, %v1952
        %v1969 = vmul.f32 %v1939, %v1953
        %v1970 = vmul.f32 %v1931, %v1954
        %v1971 = vmul.f32 %v1923, %v1955
        %v1972 = vmul.f32 %v1948, %v1952
        %v1973 = vmul.f32 %v1940, %v1953
        %v1974 = vmul.f32 %v1932, %v1954
        %v1975 = vmul.f32 %v1924, %v1955
        %v1976 = vmul.f32 %v1949, %v1952
        %v1977 = vmul.f32 %v1941, %v1953
        %v1978 = vmul.f32 %v1933, %v1954
        %v1979 = vmul.f32 %v1925, %v1955
        %v1980 = vmul.f32 %v1950, %v1952
        %v1981 = vmul.f32 %v1942, %v1953
        %v1982 = vmul.f32 %v1934, %v1954
        %v1983 = vmul.f32 %v1926, %v1955
        %v1984 = vmul.f32 %v1951, %v1952
        %v1985 = vmul.f32 %v1943, %v1953
        %v1986 = vmul.f32 %v1935, %v1954
        %v1987 = vmul.f32 %v1927, %v1955
        %v1988 = vadd.f32 %v1703, %v1956
        %v1989 = vadd.f32 %v1704, %v1957
        %v1990 = vadd.f32 %v1705, %v1958
        %v1991 = vadd.f32 %v1706, %v1959
        %v1992 = vadd.f32 %v1707, %v1960
        %v1993 = vadd.f32 %v1708, %v1961
        %v1994 = vadd.f32 %v1709, %v1962
        %v1995 = vadd.f32 %v1710, %v1963
        %v1996 = vadd.f32 %v1711, %v1964
        %v1997 = vadd.f32 %v1712, %v1965
        %v1998 = vadd.f32 %v1713, %v1966
        %v1999 = vadd.f32 %v1714, %v1967
        %v2000 = vadd.f32 %v1715, %v1968
        %v2001 = vadd.f32 %v1716, %v1969
        %v2002 = vadd.f32 %v1717, %v1970
        %v2003 = vadd.f32 %v1718, %v1971
        %v2004 = vadd.f32 %v1719, %v1972
        %v2005 = vadd.f32 %v1720, %v1973
        %v2006 = vadd.f32 %v1721, %v1974
        %v2007 = vadd.f32 %v1722, %v1975
        %v2008 = vadd.f32 %v1723, %v1976
        %v2009 = vadd.f32 %v1724, %v1977
        %v2010 = vadd.f32 %v1725, %v1978
        %v2011 = vadd.f32 %v1726, %v1979
        %v2012 = vadd.f32 %v1727, %v1980
        %v2013 = vadd.f32 %v1728, %v1981
        %v2014 = vadd.f32 %v1729, %v1982
        %v2015 = vadd.f32 %v1730, %v1983
        %v2016 = vadd.f32 %v1731, %v1984
        %v2017 = vadd.f32 %v1732, %v1985
        %v2018 = vadd.f32 %v1733, %v1986
        %v2019 = vadd.f32 %v1734, %v1987
        %v2020 = vperm.slane %v705, 7
        %v2021 = vperm.slane %v706, 7
        %v2022 = vperm.slane %v707, 7
        %v2023 = vperm.slane %v708, 7
        %v2024 = vmul.f32 %v1824, %v2020
        %v2025 = vmul.f32 %v1825, %v2021
        %v2026 = vmul.f32 %v1826, %v2022
        %v2027 = vmul.f32 %v1827, %v2023
        %v2028 = vmul.f32 %v1828, %v2020
        %v2029 = vmul.f32 %v1829, %v2021
        %v2030 = vmul.f32 %v1830, %v2022
        %v2031 = vmul.f32 %v1831, %v2023
        %v2032 = vmul.f32 %v1832, %v2020
        %v2033 = vmul.f32 %v1833, %v2021
        %v2034 = vmul.f32 %v1834, %v2022
        %v2035 = vmul.f32 %v1835, %v2023
        %v2036 = vmul.f32 %v1836, %v2020
        %v2037 = vmul.f32 %v1837, %v2021
        %v2038 = vmul.f32 %v1838, %v2022
        %v2039 = vmul.f32 %v1839, %v2023
        %v2040 = vmul.f32 %v1840, %v2020
        %v2041 = vmul.f32 %v1841, %v2021
        %v2042 = vmul.f32 %v1842, %v2022
        %v2043 = vmul.f32 %v1843, %v2023
        %v2044 = vmul.f32 %v1844, %v2020
        %v2045 = vmul.f32 %v1845, %v2021
        %v2046 = vmul.f32 %v1846, %v2022
        %v2047 = vmul.f32 %v1847, %v2023
        %v2048 = vmul.f32 %v1848, %v2020
        %v2049 = vmul.f32 %v1849, %v2021
        %v2050 = vmul.f32 %v1850, %v2022
        %v2051 = vmul.f32 %v1851, %v2023
        %v2052 = vmul.f32 %v1852, %v2020
        %v2053 = vmul.f32 %v1853, %v2021
        %v2054 = vmul.f32 %v1854, %v2022
        %v2055 = vmul.f32 %v1855, %v2023
        %v2056 = vadd.f32 %v1988, %v2024
        %v2057 = vadd.f32 %v1989, %v2025
        %v2058 = vadd.f32 %v1990, %v2026
        %v2059 = vadd.f32 %v1991, %v2027
        %v2060 = vadd.f32 %v1992, %v2028
        %v2061 = vadd.f32 %v1993, %v2029
        %v2062 = vadd.f32 %v1994, %v2030
        %v2063 = vadd.f32 %v1995, %v2031
        %v2064 = vadd.f32 %v1996, %v2032
        %v2065 = vadd.f32 %v1997, %v2033
        %v2066 = vadd.f32 %v1998, %v2034
        %v2067 = vadd.f32 %v1999, %v2035
        %v2068 = vadd.f32 %v2000, %v2036
        %v2069 = vadd.f32 %v2001, %v2037
        %v2070 = vadd.f32 %v2002, %v2038
        %v2071 = vadd.f32 %v2003, %v2039
        %v2072 = vadd.f32 %v2004, %v2040
        %v2073 = vadd.f32 %v2005, %v2041
        %v2074 = vadd.f32 %v2006, %v2042
        %v2075 = vadd.f32 %v2007, %v2043
        %v2076 = vadd.f32 %v2008, %v2044
        %v2077 = vadd.f32 %v2009, %v2045
        %v2078 = vadd.f32 %v2010, %v2046
        %v2079 = vadd.f32 %v2011, %v2047
        %v2080 = vadd.f32 %v2012, %v2048
        %v2081 = vadd.f32 %v2013, %v2049
        %v2082 = vadd.f32 %v2014, %v2050
        %v2083 = vadd.f32 %v2015, %v2051
        %v2084 = vadd.f32 %v2016, %v2052
        %v2085 = vadd.f32 %v2017, %v2053
        %v2086 = vadd.f32 %v2018, %v2054
        %v2087 = vadd.f32 %v2019, %v2055
        %2088 = vrot.lane.b32.xlu0 %v1824, 96
        %v2089 = vpop.permute.xlu0 %2088
        %2090 = vrot.lane.b32.xlu0 %v1828, 96
        %v2091 = vpop.permute.xlu0 %2090
        %2092 = vrot.lane.b32.xlu0 %v1832, 96
        %v2093 = vpop.permute.xlu0 %2092
        %2094 = vrot.lane.b32.xlu0 %v1836, 96
        %v2095 = vpop.permute.xlu0 %2094
        %2096 = vrot.lane.b32.xlu0 %v1840, 96
        %v2097 = vpop.permute.xlu0 %2096
        %2098 = vrot.lane.b32.xlu0 %v1844, 96
        %v2099 = vpop.permute.xlu0 %2098
        %2100 = vrot.lane.b32.xlu0 %v1848, 96
        %v2101 = vpop.permute.xlu0 %2100
        %2102 = vrot.lane.b32.xlu0 %v1852, 96
        %v2103 = vpop.permute.xlu0 %2102
        %2104 = vrot.lane.b32.xlu0 %v1825, 96
        %v2105 = vpop.permute.xlu0 %2104
        %2106 = vrot.lane.b32.xlu0 %v1829, 96
        %v2107 = vpop.permute.xlu0 %2106
        %2108 = vrot.lane.b32.xlu0 %v1833, 96
        %v2109 = vpop.permute.xlu0 %2108
        %2110 = vrot.lane.b32.xlu0 %v1837, 96
        %v2111 = vpop.permute.xlu0 %2110
        %2112 = vrot.lane.b32.xlu0 %v1841, 96
        %v2113 = vpop.permute.xlu0 %2112
        %2114 = vrot.lane.b32.xlu0 %v1845, 96
        %v2115 = vpop.permute.xlu0 %2114
        %2116 = vrot.lane.b32.xlu0 %v1849, 96
        %v2117 = vpop.permute.xlu0 %2116
        %2118 = vrot.lane.b32.xlu0 %v1853, 96
        %v2119 = vpop.permute.xlu0 %2118
        %2120 = vrot.lane.b32.xlu0 %v1826, 96
        %v2121 = vpop.permute.xlu0 %2120
        %2122 = vrot.lane.b32.xlu0 %v1830, 96
        %v2123 = vpop.permute.xlu0 %2122
        %2124 = vrot.lane.b32.xlu0 %v1834, 96
        %v2125 = vpop.permute.xlu0 %2124
        %2126 = vrot.lane.b32.xlu0 %v1838, 96
        %v2127 = vpop.permute.xlu0 %2126
        %2128 = vrot.lane.b32.xlu0 %v1842, 96
        %v2129 = vpop.permute.xlu0 %2128
        %2130 = vrot.lane.b32.xlu0 %v1846, 96
        %v2131 = vpop.permute.xlu0 %2130
        %2132 = vrot.lane.b32.xlu0 %v1850, 96
        %v2133 = vpop.permute.xlu0 %2132
        %2134 = vrot.lane.b32.xlu0 %v1854, 96
        %v2135 = vpop.permute.xlu0 %2134
        %2136 = vrot.lane.b32.xlu0 %v1827, 96
        %v2137 = vpop.permute.xlu0 %2136
        %2138 = vrot.lane.b32.xlu0 %v1831, 96
        %v2139 = vpop.permute.xlu0 %2138
        %2140 = vrot.lane.b32.xlu0 %v1835, 96
        %v2141 = vpop.permute.xlu0 %2140
        %2142 = vrot.lane.b32.xlu0 %v1839, 96
        %v2143 = vpop.permute.xlu0 %2142
        %2144 = vrot.lane.b32.xlu0 %v1843, 96
        %v2145 = vpop.permute.xlu0 %2144
        %2146 = vrot.lane.b32.xlu0 %v1847, 96
        %v2147 = vpop.permute.xlu0 %2146
        %2148 = vrot.lane.b32.xlu0 %v1851, 96
        %v2149 = vpop.permute.xlu0 %2148
        %2150 = vrot.lane.b32.xlu0 %v1855, 96
        %v2151 = vpop.permute.xlu0 %2150
        %v2152 = vsel %vm1238, %v2121, %v2137
        %v2153 = vsel %vm1238, %v2123, %v2139
        %v2154 = vsel %vm1238, %v2125, %v2141
        %v2155 = vsel %vm1238, %v2127, %v2143
        %v2156 = vsel %vm1238, %v2129, %v2145
        %v2157 = vsel %vm1238, %v2131, %v2147
        %v2158 = vsel %vm1238, %v2133, %v2149
        %v2159 = vsel %vm1238, %v2135, %v2151
        %v2160 = vsel %vm1238, %v2105, %v2121
        %v2161 = vsel %vm1238, %v2107, %v2123
        %v2162 = vsel %vm1238, %v2109, %v2125
        %v2163 = vsel %vm1238, %v2111, %v2127
        %v2164 = vsel %vm1238, %v2113, %v2129
        %v2165 = vsel %vm1238, %v2115, %v2131
        %v2166 = vsel %vm1238, %v2117, %v2133
        %v2167 = vsel %vm1238, %v2119, %v2135
        %v2168 = vsel %vm1238, %v2089, %v2105
        %v2169 = vsel %vm1238, %v2091, %v2107
        %v2170 = vsel %vm1238, %v2093, %v2109
        %v2171 = vsel %vm1238, %v2095, %v2111
        %v2172 = vsel %vm1238, %v2097, %v2113
        %v2173 = vsel %vm1238, %v2099, %v2115
        %v2174 = vsel %vm1238, %v2101, %v2117
        %v2175 = vsel %vm1238, %v2103, %v2119
        %v2176 = vsel %vm1238, %v2137, %v2089
        %v2177 = vsel %vm1238, %v2139, %v2091
        %v2178 = vsel %vm1238, %v2141, %v2093
        %v2179 = vsel %vm1238, %v2143, %v2095
        %v2180 = vsel %vm1238, %v2145, %v2097
        %v2181 = vsel %vm1238, %v2147, %v2099
        %v2182 = vsel %vm1238, %v2149, %v2101
        %v2183 = vsel %vm1238, %v2151, %v2103
        %v2184 = vperm.slane %v709, 0
        %v2185 = vperm.slane %v710, 0
        %v2186 = vperm.slane %v711, 0
        %v2187 = vperm.slane %v712, 0
        %v2188 = vmul.f32 %v2168, %v2184
        %v2189 = vmul.f32 %v2160, %v2185
        %v2190 = vmul.f32 %v2152, %v2186
        %v2191 = vmul.f32 %v2176, %v2187
        %v2192 = vmul.f32 %v2169, %v2184
        %v2193 = vmul.f32 %v2161, %v2185
        %v2194 = vmul.f32 %v2153, %v2186
        %v2195 = vmul.f32 %v2177, %v2187
        %v2196 = vmul.f32 %v2170, %v2184
        %v2197 = vmul.f32 %v2162, %v2185
        %v2198 = vmul.f32 %v2154, %v2186
        %v2199 = vmul.f32 %v2178, %v2187
        %v2200 = vmul.f32 %v2171, %v2184
        %v2201 = vmul.f32 %v2163, %v2185
        %v2202 = vmul.f32 %v2155, %v2186
        %v2203 = vmul.f32 %v2179, %v2187
        %v2204 = vmul.f32 %v2172, %v2184
        %v2205 = vmul.f32 %v2164, %v2185
        %v2206 = vmul.f32 %v2156, %v2186
        %v2207 = vmul.f32 %v2180, %v2187
        %v2208 = vmul.f32 %v2173, %v2184
        %v2209 = vmul.f32 %v2165, %v2185
        %v2210 = vmul.f32 %v2157, %v2186
        %v2211 = vmul.f32 %v2181, %v2187
        %v2212 = vmul.f32 %v2174, %v2184
        %v2213 = vmul.f32 %v2166, %v2185
        %v2214 = vmul.f32 %v2158, %v2186
        %v2215 = vmul.f32 %v2182, %v2187
        %v2216 = vmul.f32 %v2175, %v2184
        %v2217 = vmul.f32 %v2167, %v2185
        %v2218 = vmul.f32 %v2159, %v2186
        %v2219 = vmul.f32 %v2183, %v2187
        %v2220 = vadd.f32 %v2056, %v2188
        %v2221 = vadd.f32 %v2057, %v2189
        %v2222 = vadd.f32 %v2058, %v2190
        %v2223 = vadd.f32 %v2059, %v2191
        %v2224 = vadd.f32 %v2060, %v2192
        %v2225 = vadd.f32 %v2061, %v2193
        %v2226 = vadd.f32 %v2062, %v2194
        %v2227 = vadd.f32 %v2063, %v2195
        %v2228 = vadd.f32 %v2064, %v2196
        %v2229 = vadd.f32 %v2065, %v2197
        %v2230 = vadd.f32 %v2066, %v2198
        %v2231 = vadd.f32 %v2067, %v2199
        %v2232 = vadd.f32 %v2068, %v2200
        %v2233 = vadd.f32 %v2069, %v2201
        %v2234 = vadd.f32 %v2070, %v2202
        %v2235 = vadd.f32 %v2071, %v2203
        %v2236 = vadd.f32 %v2072, %v2204
        %v2237 = vadd.f32 %v2073, %v2205
        %v2238 = vadd.f32 %v2074, %v2206
        %v2239 = vadd.f32 %v2075, %v2207
        %v2240 = vadd.f32 %v2076, %v2208
        %v2241 = vadd.f32 %v2077, %v2209
        %v2242 = vadd.f32 %v2078, %v2210
        %v2243 = vadd.f32 %v2079, %v2211
        %v2244 = vadd.f32 %v2080, %v2212
        %v2245 = vadd.f32 %v2081, %v2213
        %v2246 = vadd.f32 %v2082, %v2214
        %v2247 = vadd.f32 %v2083, %v2215
        %v2248 = vadd.f32 %v2084, %v2216
        %v2249 = vadd.f32 %v2085, %v2217
        %v2250 = vadd.f32 %v2086, %v2218
        %v2251 = vadd.f32 %v2087, %v2219
        %s2252 = scalar_lea.vmem [#allocation10], 1
        %v2253 = vld [vmem:[%s2252] ss:$4 sm:$0xf]
        %v2255 = vperm.slane %v2253, 0
        %v2256 = vperm.slane %v2253, 1
        %v2257 = vperm.slane %v2253, 2
        %v2258 = vperm.slane %v2253, 3
        %v2263 = vadd.f32 %v2220, %v2255
        %v2264 = vadd.f32 %v2221, %v2256
        %v2265 = vadd.f32 %v2222, %v2257
        %v2266 = vadd.f32 %v2223, %v2258
        %v2267 = vadd.f32 %v2224, %v2255
        %v2268 = vadd.f32 %v2225, %v2256
        %v2269 = vadd.f32 %v2226, %v2257
        %v2270 = vadd.f32 %v2227, %v2258
        %v2271 = vadd.f32 %v2228, %v2255
        %v2272 = vadd.f32 %v2229, %v2256
        %v2273 = vadd.f32 %v2230, %v2257
        %v2274 = vadd.f32 %v2231, %v2258
        %v2275 = vadd.f32 %v2232, %v2255
        %v2276 = vadd.f32 %v2233, %v2256
        %v2277 = vadd.f32 %v2234, %v2257
        %v2278 = vadd.f32 %v2235, %v2258
        %v2279 = vadd.f32 %v2236, %v2255
        %v2280 = vadd.f32 %v2237, %v2256
        %v2281 = vadd.f32 %v2238, %v2257
        %v2282 = vadd.f32 %v2239, %v2258
        %v2283 = vadd.f32 %v2240, %v2255
        %v2284 = vadd.f32 %v2241, %v2256
        %v2285 = vadd.f32 %v2242, %v2257
        %v2286 = vadd.f32 %v2243, %v2258
        %v2287 = vadd.f32 %v2244, %v2255
        %v2288 = vadd.f32 %v2245, %v2256
        %v2289 = vadd.f32 %v2246, %v2257
        %v2290 = vadd.f32 %v2247, %v2258
        %v2291 = vadd.f32 %v2248, %v2255
        %v2292 = vadd.f32 %v2249, %v2256
        %v2293 = vadd.f32 %v2250, %v2257
        %v2294 = vadd.f32 %v2251, %v2258
        %v2295 = vmax.f32 %v2263, 0.0
        %v2296 = vmax.f32 %v2264, 0.0
        %v2297 = vmax.f32 %v2265, 0.0
        %v2298 = vmax.f32 %v2266, 0.0
        %v2299 = vmax.f32 %v2267, 0.0
        %v2300 = vmax.f32 %v2268, 0.0
        %v2301 = vmax.f32 %v2269, 0.0
        %v2302 = vmax.f32 %v2270, 0.0
        %v2303 = vmax.f32 %v2271, 0.0
        %v2304 = vmax.f32 %v2272, 0.0
        %v2305 = vmax.f32 %v2273, 0.0
        %v2306 = vmax.f32 %v2274, 0.0
        %v2307 = vmax.f32 %v2275, 0.0
        %v2308 = vmax.f32 %v2276, 0.0
        %v2309 = vmax.f32 %v2277, 0.0
        %v2310 = vmax.f32 %v2278, 0.0
        %v2311 = vmax.f32 %v2279, 0.0
        %v2312 = vmax.f32 %v2280, 0.0
        %v2313 = vmax.f32 %v2281, 0.0
        %v2314 = vmax.f32 %v2282, 0.0
        %v2315 = vmax.f32 %v2283, 0.0
        %v2316 = vmax.f32 %v2284, 0.0
        %v2317 = vmax.f32 %v2285, 0.0
        %v2318 = vmax.f32 %v2286, 0.0
        %v2319 = vmax.f32 %v2287, 0.0
        %v2320 = vmax.f32 %v2288, 0.0
        %v2321 = vmax.f32 %v2289, 0.0
        %v2322 = vmax.f32 %v2290, 0.0
        %v2323 = vmax.f32 %v2291, 0.0
        %v2324 = vmax.f32 %v2292, 0.0
        %v2325 = vmax.f32 %v2293, 0.0
        %v2326 = vmax.f32 %v2294, 0.0
        %v2327 = vmin.f32 %v2295, 6.0
        %v2328 = vmin.f32 %v2296, 6.0
        %v2329 = vmin.f32 %v2297, 6.0
        %v2330 = vmin.f32 %v2298, 6.0
        %v2331 = vmin.f32 %v2299, 6.0
        %v2332 = vmin.f32 %v2300, 6.0
        %v2333 = vmin.f32 %v2301, 6.0
        %v2334 = vmin.f32 %v2302, 6.0
        %v2335 = vmin.f32 %v2303, 6.0
        %v2336 = vmin.f32 %v2304, 6.0
        %v2337 = vmin.f32 %v2305, 6.0
        %v2338 = vmin.f32 %v2306, 6.0
        %v2339 = vmin.f32 %v2307, 6.0
        %v2340 = vmin.f32 %v2308, 6.0
        %v2341 = vmin.f32 %v2309, 6.0
        %v2342 = vmin.f32 %v2310, 6.0
        %v2343 = vmin.f32 %v2311, 6.0
        %v2344 = vmin.f32 %v2312, 6.0
        %v2345 = vmin.f32 %v2313, 6.0
        %v2346 = vmin.f32 %v2314, 6.0
        %v2347 = vmin.f32 %v2315, 6.0
        %v2348 = vmin.f32 %v2316, 6.0
        %v2349 = vmin.f32 %v2317, 6.0
        %v2350 = vmin.f32 %v2318, 6.0
        %v2351 = vmin.f32 %v2319, 6.0
        %v2352 = vmin.f32 %v2320, 6.0
        %v2353 = vmin.f32 %v2321, 6.0
        %v2354 = vmin.f32 %v2322, 6.0
        %v2355 = vmin.f32 %v2323, 6.0
        %v2356 = vmin.f32 %v2324, 6.0
        %v2357 = vmin.f32 %v2325, 6.0
        %v2358 = vmin.f32 %v2326, 6.0
        %v2359 = vpack.c.bf16 %v2331, %v2327
        %v2360 = vpack.c.bf16 %v2332, %v2328
        %v2361 = vpack.c.bf16 %v2333, %v2329
        %v2362 = vpack.c.bf16 %v2334, %v2330
        %v2363 = vpack.c.bf16 %v2339, %v2335
        %v2364 = vpack.c.bf16 %v2340, %v2336
        %v2365 = vpack.c.bf16 %v2341, %v2337
        %v2366 = vpack.c.bf16 %v2342, %v2338
        %v2367 = vpack.c.bf16 %v2347, %v2343
        %v2368 = vpack.c.bf16 %v2348, %v2344
        %v2369 = vpack.c.bf16 %v2349, %v2345
        %v2370 = vpack.c.bf16 %v2350, %v2346
        %v2371 = vpack.c.bf16 %v2355, %v2351
        %v2372 = vpack.c.bf16 %v2356, %v2352
        %v2373 = vpack.c.bf16 %v2357, %v2353
        %v2374 = vpack.c.bf16 %v2358, %v2354
        %v2375 = vld [vmem:[#allocation8] sm:$0xf]
        %v2376 = vld [vmem:[#allocation8 + $0x4] sm:$0xf]
        %v2377 = vld [vmem:[#allocation8 + $0x8] sm:$0xf]
        %v2378 = vld [vmem:[#allocation8 + $0xc] sm:$0xf]
        %v2379 = vld [vmem:[#allocation8 + $0x10] sm:$0xf]
        %v2380 = vld [vmem:[#allocation8 + $0x14] sm:$0xf]
        %v2381 = vld [vmem:[#allocation8 + $0x18] sm:$0xf]
        %v2382 = vld [vmem:[#allocation8 + $0x1c] sm:$0xf]
        %v2383 = vld [vmem:[#allocation8 + $0x20] sm:$0xf]
        %v2384 = vld [vmem:[#allocation8 + $0x24] sm:$0xf]
        %v2385 = vld [vmem:[#allocation8 + $0x28] sm:$0xf]
        %v2386 = vld [vmem:[#allocation8 + $0x2c] sm:$0xf]
        %v2387 = vld [vmem:[#allocation8 + $0x30] sm:$0xf]
        %v2388 = vld [vmem:[#allocation8 + $0x34] sm:$0xf]
        %v2389 = vld [vmem:[#allocation8 + $0x38] sm:$0xf]
        %v2390 = vld [vmem:[#allocation8 + $0x3c] sm:$0xf]
        %v2391 = vld [vmem:[#allocation8 + $0x40] sm:$0xf]
        %v2392 = vld [vmem:[#allocation8 + $0x44] sm:$0xf]
        %v2393 = vld [vmem:[#allocation8 + $0x48] sm:$0xf]
        %v2394 = vld [vmem:[#allocation8 + $0x4c] sm:$0xf]
        %v2395 = vld [vmem:[#allocation8 + $0x50] sm:$0xf]
        %v2396 = vld [vmem:[#allocation8 + $0x54] sm:$0xf]
        %v2397 = vld [vmem:[#allocation8 + $0x58] sm:$0xf]
        %v2398 = vld [vmem:[#allocation8 + $0x5c] sm:$0xf]
        %v2399 = vld [vmem:[#allocation8 + $0x60] sm:$0xf]
        %v2400 = vld [vmem:[#allocation8 + $0x64] sm:$0xf]
        %v2401 = vld [vmem:[#allocation8 + $0x68] sm:$0xf]
        %v2402 = vld [vmem:[#allocation8 + $0x6c] sm:$0xf]
        %v2403 = vld [vmem:[#allocation8 + $0x70] sm:$0xf]
        %v2404 = vld [vmem:[#allocation8 + $0x74] sm:$0xf]
        %v2405 = vld [vmem:[#allocation8 + $0x78] sm:$0xf]
        %v2406 = vld [vmem:[#allocation8 + $0x7c] sm:$0xf]
        %v2407 = vld [vmem:[#allocation8 + $0x80] sm:$0xf]
        %v2408 = vld [vmem:[#allocation8 + $0x84] sm:$0xf]
        %v2409 = vld [vmem:[#allocation8 + $0x88] sm:$0xf]
        %v2410 = vld [vmem:[#allocation8 + $0x8c] sm:$0xf]
        %v2411 = vld [vmem:[#allocation8 + $0x90] sm:$0xf]
        %v2412 = vld [vmem:[#allocation8 + $0x94] sm:$0xf]
        %v2413 = vld [vmem:[#allocation8 + $0x98] sm:$0xf]
        %v2414 = vld [vmem:[#allocation8 + $0x9c] sm:$0xf]
        %v2415 = vld [vmem:[#allocation8 + $0xa0] sm:$0xf]
        %v2416 = vld [vmem:[#allocation8 + $0xa4] sm:$0xf]
        %v2417 = vld [vmem:[#allocation8 + $0xa8] sm:$0xf]
        %v2418 = vld [vmem:[#allocation8 + $0xac] sm:$0xf]
        %v2419 = vld [vmem:[#allocation8 + $0xb0] sm:$0xf]
        %v2420 = vld [vmem:[#allocation8 + $0xb4] sm:$0xf]
        %v2421 = vld [vmem:[#allocation8 + $0xb8] sm:$0xf]
        %v2422 = vld [vmem:[#allocation8 + $0xbc] sm:$0xf]
        %v2423 = vld [vmem:[#allocation8 + $0xc0] sm:$0xf]
        %v2424 = vld [vmem:[#allocation8 + $0xc4] sm:$0xf]
        %v2425 = vld [vmem:[#allocation8 + $0xc8] sm:$0xf]
        %v2426 = vld [vmem:[#allocation8 + $0xcc] sm:$0xf]
        %v2427 = vld [vmem:[#allocation8 + $0xd0] sm:$0xf]
        %v2428 = vld [vmem:[#allocation8 + $0xd4] sm:$0xf]
        %v2429 = vld [vmem:[#allocation8 + $0xd8] sm:$0xf]
        %v2430 = vld [vmem:[#allocation8 + $0xdc] sm:$0xf]
        %v2431 = vld [vmem:[#allocation8 + $0xe0] sm:$0xf]
        %v2432 = vld [vmem:[#allocation8 + $0xe4] sm:$0xf]
        %v2433 = vld [vmem:[#allocation8 + $0xe8] sm:$0xf]
        %v2434 = vld [vmem:[#allocation8 + $0xec] sm:$0xf]
        %v2435 = vld [vmem:[#allocation8 + $0xf0] sm:$0xf]
        %v2436 = vld [vmem:[#allocation8 + $0xf4] sm:$0xf]
        %v2437 = vld [vmem:[#allocation8 + $0xf8] sm:$0xf]
        %v2438 = vld [vmem:[#allocation8 + $0xfc] sm:$0xf]
        %v2439 = vld [vmem:[#allocation10 + $0x2] sm:$0x1]
        %v2440 = vperm.slane %v2439, 0
        %v2505 = vunpack.c.l.b16 %v2375
        %v2506 = vunpack.c.l.b16 %v2376
        %v2507 = vunpack.c.l.b16 %v2377
        %v2508 = vunpack.c.l.b16 %v2378
        %v2509 = vunpack.c.l.b16 %v2379
        %v2510 = vunpack.c.l.b16 %v2380
        %v2511 = vunpack.c.l.b16 %v2381
        %v2512 = vunpack.c.l.b16 %v2382
        %v2513 = vunpack.c.l.b16 %v2383
        %v2514 = vunpack.c.l.b16 %v2384
        %v2515 = vunpack.c.l.b16 %v2385
        %v2516 = vunpack.c.l.b16 %v2386
        %v2517 = vunpack.c.l.b16 %v2387
        %v2518 = vunpack.c.l.b16 %v2388
        %v2519 = vunpack.c.l.b16 %v2389
        %v2520 = vunpack.c.l.b16 %v2390
        %v2521 = vunpack.c.l.b16 %v2391
        %v2522 = vunpack.c.l.b16 %v2392
        %v2523 = vunpack.c.l.b16 %v2393
        %v2524 = vunpack.c.l.b16 %v2394
        %v2525 = vunpack.c.l.b16 %v2395
        %v2526 = vunpack.c.l.b16 %v2396
        %v2527 = vunpack.c.l.b16 %v2397
        %v2528 = vunpack.c.l.b16 %v2398
        %v2529 = vunpack.c.l.b16 %v2399
        %v2530 = vunpack.c.l.b16 %v2400
        %v2531 = vunpack.c.l.b16 %v2401
        %v2532 = vunpack.c.l.b16 %v2402
        %v2533 = vunpack.c.l.b16 %v2403
        %v2534 = vunpack.c.l.b16 %v2404
        %v2535 = vunpack.c.l.b16 %v2405
        %v2536 = vunpack.c.l.b16 %v2406
        %v2537 = vunpack.c.l.b16 %v2407
        %v2538 = vunpack.c.l.b16 %v2408
        %v2539 = vunpack.c.l.b16 %v2409
        %v2540 = vunpack.c.l.b16 %v2410
        %v2541 = vunpack.c.l.b16 %v2411
        %v2542 = vunpack.c.l.b16 %v2412
        %v2543 = vunpack.c.l.b16 %v2413
        %v2544 = vunpack.c.l.b16 %v2414
        %v2545 = vunpack.c.l.b16 %v2415
        %v2546 = vunpack.c.l.b16 %v2416
        %v2547 = vunpack.c.l.b16 %v2417
        %v2548 = vunpack.c.l.b16 %v2418
        %v2549 = vunpack.c.l.b16 %v2419
        %v2550 = vunpack.c.l.b16 %v2420
        %v2551 = vunpack.c.l.b16 %v2421
        %v2552 = vunpack.c.l.b16 %v2422
        %v2553 = vunpack.c.l.b16 %v2423
        %v2554 = vunpack.c.l.b16 %v2424
        %v2555 = vunpack.c.l.b16 %v2425
        %v2556 = vunpack.c.l.b16 %v2426
        %v2557 = vunpack.c.l.b16 %v2427
        %v2558 = vunpack.c.l.b16 %v2428
        %v2559 = vunpack.c.l.b16 %v2429
        %v2560 = vunpack.c.l.b16 %v2430
        %v2561 = vunpack.c.l.b16 %v2431
        %v2562 = vunpack.c.l.b16 %v2432
        %v2563 = vunpack.c.l.b16 %v2433
        %v2564 = vunpack.c.l.b16 %v2434
        %v2565 = vunpack.c.l.b16 %v2435
        %v2566 = vunpack.c.l.b16 %v2436
        %v2567 = vunpack.c.l.b16 %v2437
        %v2568 = vunpack.c.l.b16 %v2438
        %v2569 = vpack.c.b16 %v2506, %v2505
        %v2570 = vpack.c.b16 %v2508, %v2507
        %v2571 = vpack.c.b16 %v2510, %v2509
        %v2572 = vpack.c.b16 %v2512, %v2511
        %v2573 = vpack.c.b16 %v2514, %v2513
        %v2574 = vpack.c.b16 %v2516, %v2515
        %v2575 = vpack.c.b16 %v2518, %v2517
        %v2576 = vpack.c.b16 %v2520, %v2519
        %v2577 = vpack.c.b16 %v2522, %v2521
        %v2578 = vpack.c.b16 %v2524, %v2523
        %v2579 = vpack.c.b16 %v2526, %v2525
        %v2580 = vpack.c.b16 %v2528, %v2527
        %v2581 = vpack.c.b16 %v2530, %v2529
        %v2582 = vpack.c.b16 %v2532, %v2531
        %v2583 = vpack.c.b16 %v2534, %v2533
        %v2584 = vpack.c.b16 %v2536, %v2535
        %v2585 = vpack.c.b16 %v2538, %v2537
        %v2586 = vpack.c.b16 %v2540, %v2539
        %v2587 = vpack.c.b16 %v2542, %v2541
        %v2588 = vpack.c.b16 %v2544, %v2543
        %v2589 = vpack.c.b16 %v2546, %v2545
        %v2590 = vpack.c.b16 %v2548, %v2547
        %v2591 = vpack.c.b16 %v2550, %v2549
        %v2592 = vpack.c.b16 %v2552, %v2551
        %v2593 = vpack.c.b16 %v2554, %v2553
        %v2594 = vpack.c.b16 %v2556, %v2555
        %v2595 = vpack.c.b16 %v2558, %v2557
        %v2596 = vpack.c.b16 %v2560, %v2559
        %v2597 = vpack.c.b16 %v2562, %v2561
        %v2598 = vpack.c.b16 %v2564, %v2563
        %v2599 = vpack.c.b16 %v2566, %v2565
        %v2600 = vpack.c.b16 %v2568, %v2567
        %2633 = vmatpush.bf16.msra.mxu0 %v2576
        %2634 = vmatpush.bf16.msra.mxu0 %v2575
        %2635 = vmatpush.bf16.msra.mxu0 %v2574
        %2636 = vmatpush.bf16.msra.mxu0 %v2573
        %2637 = vmatpush.bf16.msra.mxu0 %v2572
        %2638 = vmatpush.bf16.msra.mxu0 %v2571
        %2639 = vmatpush.bf16.msra.mxu0 %v2570
        %2640 = vmatpush.bf16.msra.mxu0 %v2569
        %2641 = vmatmul.bf16.gmra.mxu0 %v2359
        %v2642 = vpop.f32.mrf.mxu0
        %v2643 = vadd.f32 %v2440, %v2642
        %v2644 = vpop.f32.mrf.mxu0
        %v2645 = vadd.f32 %v2440, %v2644
        %2646 = vmatmul.bf16.gmra.mxu0 %v2363
        %v2647 = vpop.f32.mrf.mxu0
        %v2648 = vadd.f32 %v2440, %v2647
        %v2649 = vpop.f32.mrf.mxu0
        %v2650 = vadd.f32 %v2440, %v2649
        %2651 = vmatmul.bf16.gmra.mxu0 %v2367
        %v2652 = vpop.f32.mrf.mxu0
        %v2653 = vadd.f32 %v2440, %v2652
        %v2654 = vpop.f32.mrf.mxu0
        %v2655 = vadd.f32 %v2440, %v2654
        %2656 = vmatmul.bf16.gmra.mxu0 %v2371
        %v2657 = vpop.f32.mrf.mxu0
        %v2658 = vadd.f32 %v2440, %v2657
        %v2659 = vpop.f32.mrf.mxu0
        %v2660 = vadd.f32 %v2440, %v2659
        %2661 = vdwg.mxu0
        %2662 = vmatpush.bf16.msra.mxu0 %v2584
        %2663 = vmatpush.bf16.msra.mxu0 %v2583
        %2664 = vmatpush.bf16.msra.mxu0 %v2582
        %2665 = vmatpush.bf16.msra.mxu0 %v2581
        %2666 = vmatpush.bf16.msra.mxu0 %v2580
        %2667 = vmatpush.bf16.msra.mxu0 %v2579
        %2668 = vmatpush.bf16.msra.mxu0 %v2578
        %2669 = vmatpush.bf16.msra.mxu0 %v2577
        %2670 = vmatmul.bf16.gmra.mxu0 %v2360
        %v2671 = vpop.f32.mrf.mxu0
        %v2672 = vadd.f32 %v2643, %v2671
        %v2673 = vpop.f32.mrf.mxu0
        %v2674 = vadd.f32 %v2645, %v2673
        %2675 = vmatmul.bf16.gmra.mxu0 %v2364
        %v2676 = vpop.f32.mrf.mxu0
        %v2677 = vadd.f32 %v2648, %v2676
        %v2678 = vpop.f32.mrf.mxu0
        %v2679 = vadd.f32 %v2650, %v2678
        %2680 = vmatmul.bf16.gmra.mxu0 %v2368
        %v2681 = vpop.f32.mrf.mxu0
        %v2682 = vadd.f32 %v2653, %v2681
        %v2683 = vpop.f32.mrf.mxu0
        %v2684 = vadd.f32 %v2655, %v2683
        %2685 = vmatmul.bf16.gmra.mxu0 %v2372
        %v2686 = vpop.f32.mrf.mxu0
        %v2687 = vadd.f32 %v2658, %v2686
        %v2688 = vpop.f32.mrf.mxu0
        %v2689 = vadd.f32 %v2660, %v2688
        %2690 = vdwg.mxu0
        %2691 = vmatpush.bf16.msra.mxu0 %v2592
        %2692 = vmatpush.bf16.msra.mxu0 %v2591
        %2693 = vmatpush.bf16.msra.mxu0 %v2590
        %2694 = vmatpush.bf16.msra.mxu0 %v2589
        %2695 = vmatpush.bf16.msra.mxu0 %v2588
        %2696 = vmatpush.bf16.msra.mxu0 %v2587
        %2697 = vmatpush.bf16.msra.mxu0 %v2586
        %2698 = vmatpush.bf16.msra.mxu0 %v2585
        %2699 = vmatmul.bf16.gmra.mxu0 %v2361
        %v2700 = vpop.f32.mrf.mxu0
        %v2701 = vadd.f32 %v2672, %v2700
        %v2702 = vpop.f32.mrf.mxu0
        %v2703 = vadd.f32 %v2674, %v2702
        %2704 = vmatmul.bf16.gmra.mxu0 %v2365
        %v2705 = vpop.f32.mrf.mxu0
        %v2706 = vadd.f32 %v2677, %v2705
        %v2707 = vpop.f32.mrf.mxu0
        %v2708 = vadd.f32 %v2679, %v2707
        %2709 = vmatmul.bf16.gmra.mxu0 %v2369
        %v2710 = vpop.f32.mrf.mxu0
        %v2711 = vadd.f32 %v2682, %v2710
        %v2712 = vpop.f32.mrf.mxu0
        %v2713 = vadd.f32 %v2684, %v2712
        %2714 = vmatmul.bf16.gmra.mxu0 %v2373
        %v2715 = vpop.f32.mrf.mxu0
        %v2716 = vadd.f32 %v2687, %v2715
        %v2717 = vpop.f32.mrf.mxu0
        %v2718 = vadd.f32 %v2689, %v2717
        %2719 = vdwg.mxu0
        %2720 = vmatpush.bf16.msra.mxu0 %v2600
        %2721 = vmatpush.bf16.msra.mxu0 %v2599
        %2722 = vmatpush.bf16.msra.mxu0 %v2598
        %2723 = vmatpush.bf16.msra.mxu0 %v2597
        %2724 = vmatpush.bf16.msra.mxu0 %v2596
        %2725 = vmatpush.bf16.msra.mxu0 %v2595
        %2726 = vmatpush.bf16.msra.mxu0 %v2594
        %2727 = vmatpush.bf16.msra.mxu0 %v2593
        %2728 = vmatmul.bf16.gmra.mxu0 %v2362
        %v2729 = vpop.f32.mrf.mxu0
        %v2730 = vadd.f32 %v2701, %v2729
        %v2731 = vpop.f32.mrf.mxu0
        %v2732 = vadd.f32 %v2703, %v2731
        %2733 = vmatmul.bf16.gmra.mxu0 %v2366
        %v2734 = vpop.f32.mrf.mxu0
        %v2735 = vadd.f32 %v2706, %v2734
        %v2736 = vpop.f32.mrf.mxu0
        %v2737 = vadd.f32 %v2708, %v2736
        %2738 = vmatmul.bf16.gmra.mxu0 %v2370
        %v2739 = vpop.f32.mrf.mxu0
        %v2740 = vadd.f32 %v2711, %v2739
        %v2741 = vpop.f32.mrf.mxu0
        %v2742 = vadd.f32 %v2713, %v2741
        %2743 = vmatmul.bf16.gmra.mxu0 %v2374
        %v2744 = vpop.f32.mrf.mxu0
        %v2745 = vadd.f32 %v2716, %v2744
        %v2746 = vpop.f32.mrf.mxu0
        %v2747 = vadd.f32 %v2718, %v2746
        %2748 = vdwg.mxu0
        %v2749 = vadd.f32 %v2730, %v311
        %v2750 = vadd.f32 %v2732, %v312
        %v2751 = vadd.f32 %v2735, %v313
        %v2752 = vadd.f32 %v2737, %v314
        %v2753 = vadd.f32 %v2740, %v315
        %v2754 = vadd.f32 %v2742, %v316
        %v2755 = vadd.f32 %v2745, %v317
        %v2756 = vadd.f32 %v2747, %v318
        %2757 = vst [vmem:[%s308] sm:$0xff] %v2749
        %2758 = vst [vmem:[%s308 + $0x8] sm:$0xff] %v2750
        %2759 = vst [vmem:[%s308 + $0x10] sm:$0xff] %v2751
        %2760 = vst [vmem:[%s308 + $0x18] sm:$0xff] %v2752
        %2761 = vst [vmem:[%s308 + $0x20] sm:$0xff] %v2753
        %2762 = vst [vmem:[%s308 + $0x28] sm:$0xff] %v2754
        %2763 = vst [vmem:[%s308 + $0x30] sm:$0xff] %v2755
        %2764 = vst [vmem:[%s308 + $0x38] sm:$0xff] %v2756
        %s2765 = sand.u32 %s142, 1
        %s2766 = scalar_lea.sflag [#allocation4], %s2765
        %s2767 = sand.u32 %s142, 1
        %s2768 = smul.addr %s2767, 64
        %s2769 = scalar_lea.vmem [#allocation11], %s2768
        // Predicated region
        $region61: #{tpu_custom_call.1} parent=39 // pred_check
          %p2770 = pneg %p152
        $region62: #{tpu_custom_call.1} parent=39 // pred_check_branch
          %2772 = sbr.rel (%p2770) target = $region64
        $region63: #{tpu_custom_call.1} parent=39 // pred_region
          %s2773 = smul.u32 8, %s24
          %2775 = vsyncadd %s2766, 0
          %s2776 = smul.addr %s2773, 8
          %s2777 = scalar_lea.hbm %s5, %s2776
          %s2778 = sshll.u32 %s2769, 4
          %s2779 = int_to_ptr.vmem [resolvable:$true] %s2778
          %s2780 = sshll.u32 %s2777, 4
          %s2781 = int_to_ptr.hbm [resolvable:$true] %s2780
          %2786 = dma.vmem_to_hbm [thread:$0]  %s2779, 1024, %s2781, %s2766, 128, 128, 8
        $region64: #{tpu_custom_call.1} parent=39 // pred_fallthru
          _
      $region40: #{tpu_custom_call.1} parent=5 // pred_fallthru
        _
      %p2787 = scmp.le.s32.totalorder 2, %s19
      // Predicated region
      $region65: #{tpu_custom_call.1} parent=5 // pred_check
        %p2788 = pneg %p2787
      $region66: #{tpu_custom_call.1} parent=5 // pred_check_branch
        %2790 = sbr.rel (%p2788) target = $region68
      $region67: #{tpu_custom_call.1} parent=5 // pred_region
        %s2791 = ssub.s32 %s19, 2
        // Predicated region
        $region69: #{tpu_custom_call.1} parent=67 // pred_check
          %p2792 = pneg %p158
        $region70: #{tpu_custom_call.1} parent=67 // pred_check_branch
          %2794 = sbr.rel (%p2792) target = $region72
        $region71: #{tpu_custom_call.1} parent=67 // pred_region
          %s2795 = sand.u32 %s143, 1
          %s2796 = scalar_lea.sflag [#allocation4], %s2795
          %s2797 = sand.u32 %s143, 1
          %s2798 = smul.addr %s2797, 64
          %s2799 = scalar_lea.vmem [#allocation11], %s2798
          %2801 = dma.done %s2796, 1024
        $region72: #{tpu_custom_call.1} parent=67 // pred_fallthru
          _
      $region68: #{tpu_custom_call.1} parent=5 // pred_fallthru
        _
    $region6: #{tpu_custom_call.1} parent=1 // loop_footer
      %s23 = sadd.s32 1, %s19
    $region7: #{tpu_custom_call.1} parent=1 // loop_footer_branch
      %18 = sbr.rel target = $region3
    $region8: #{tpu_custom_call.1} parent=1 // loop_exit
      _
    %2802 = vsyncpa [#allocation3], 1
    %s2803 = scalar_lea.sflag [#allocation3], 1
    %2804 = vsyncpa %s2803, 1
    %2805 = vsyncpa [#allocation6], 1
    %2806 = vsyncpa [#allocation9], 1
    %2807 = vsyncpa [#allocation4], 1
    %s2808 = scalar_lea.sflag [#allocation4], 1
    %2809 = vsyncpa %s2808, 1

</llo_original>
